<compile_context>
chip_gen: v5e
topology: v5e:2x2
jax: 0.10.0
libtpu: 0.0.40
codegen_flags: <defaults>
</compile_context>

<pallas_src>
import functools
import numpy as np
import jax
import jax.numpy as jnp
from jax import lax
from jax.experimental import pallas as pl
from jax.experimental.pallas import tpu as pltpu

_BN_EPS = 1e-5


def _round_up(x, m):
    return (x + m - 1) // m * m


# ----------------------------------------------------------------------------
# Fused DoubleConv kernel (one grid cell = one (image, row-band))
# ----------------------------------------------------------------------------

def _double_conv_kernel(x_ref, w1_ref, s1_ref, t1_ref, w2_ref, s2_ref, t2_ref,
                        o_ref, mid3_ref, *, tH, H, W, Wq, row_taps):
    """Fused (conv3x3 + BN + ReLU) x 2 on one flattened, im2col'd row band.

    x_ref:    ((tH+2*halo)*Wq, K1) bf16  flattened kx-im2col'd input band
                                         (K1 = 9*Cin if row_taps==1 else 3*Cin)
    w1_ref:   (row_taps, K1, Cmid) bf16  row-tap-major, kx folded into K
    s1/t1:    (1, Cmid)            f32   folded BN1 scale / shift (incl. bias)
    w2_ref:   (3, 3*Cmid, Cout)    bf16  ky-major, kx folded into K
    s2/t2:    (1, Cout)            f32
    o_ref:    (tH, Wq, Cout)       f32   padded output block (W de-pad outside)
    mid3_ref: ((tH+2)*Wq, 3*Cmid)  bf16  VMEM-resident kx-folded mid activation
    """
    Cmid = s1_ref.shape[-1]
    Cout = o_ref.shape[-1]
    mid_rows = tH + 2
    Lm = mid_rows * Wq
    Lo = tH * Wq

    # ---- conv1: 1 (full im2col) or 3 (kx-im2col) sublane-aligned dots,
    #      register-accumulated (no VMEM accumulator round trips).
    acc = None
    for r in range(row_taps):
        xs = x_ref[pl.ds(r * Wq, Lm), :]            # static start, Wq % 8 == 0
        p = jnp.dot(xs, w1_ref[r], preferred_element_type=jnp.float32)
        acc = p if acc is None else acc + p

    # ---- BN1 + ReLU (f32), then conv2's zero-padding ring via an iota mask
    #      computed in-kernel (no mask input / DMA).
    m = jnp.maximum(acc * s1_ref[...] + t1_ref[...], 0.0)
    m = m.reshape(mid_rows, Wq, Cmid)               # free: Wq % 8 == 0
    r_idx = lax.broadcasted_iota(jnp.int32, (mid_rows, Wq, 1), 0)
    c_idx = lax.broadcasted_iota(jnp.int32, (mid_rows, Wq, 1), 1)
    g_row = pl.program_id(1) * tH - 1 + r_idx       # global mid-row index
    valid = (g_row >= 0) & (g_row < H) & (c_idx < W)
    m = jnp.where(valid, m, 0.0)

    # ---- fold conv2's kx taps into channels: block kx holds the row shifted by
    #      (kx-1) columns with exact zero padding at the W borders.
    zcol = jnp.zeros((mid_rows, 1, Cmid), jnp.float32)
    m_l = jnp.concatenate([zcol, m[:, :-1, :]], axis=1)     # column w-1
    m_r = jnp.concatenate([m[:, 1:, :], zcol], axis=1)      # column w+1
    mid3 = jnp.concatenate([m_l, m, m_r], axis=-1)          # (mid_rows, Wq, 3*Cmid)
    mid3_ref[...] = mid3.reshape(Lm, 3 * Cmid).astype(mid3_ref.dtype)

    # ---- conv2: 3 aligned dots over ky with K = 3*Cmid, register accumulation.
    acc2 = None
    for ky in range(3):
        ms = mid3_ref[pl.ds(ky * Wq, Lo), :]        # static start, Wq % 8 == 0
        p = jnp.dot(ms, w2_ref[ky], preferred_element_type=jnp.float32)
        acc2 = p if acc2 is None else acc2 + p

    # ---- BN2 + ReLU; write the padded block directly (no in-kernel W slice).
    y = jnp.maximum(acc2 * s2_ref[...] + t2_ref[...], 0.0)
    o_ref[...] = y.reshape(tH, Wq, Cout).astype(o_ref.dtype)


# ----------------------------------------------------------------------------
# Wrapper: im2col, band gathering, VMEM-aware tiling, pallas_call
# ----------------------------------------------------------------------------

def double_conv_pallas(x_nhwc, params, *, band_rows=None):
    N, H, W, Cin = x_nhwc.shape
    c1, c2 = params['c1'], params['c2']
    Cmid = c1['w_hwio'].shape[-1]
    Cout = c2['w_hwio'].shape[-1]

    Wq = _round_up(W, 8)                         # sublane-aligned width

    # Fold kx into K always; for tiny Cin fold all 9 taps (K = 9*Cin, one dot).
    row_taps = 1 if 9 * Cin <= 128 else 3
    halo = 1 if row_taps == 1 else 2             # extra rows each side per band
    K1 = (9 if row_taps == 1 else 3) * Cin

    # ---- kernel-format weights (kx folded into K) and folded BN affine.
    w1_hwio = c1['w_hwio']                       # (3, 3, Cin, Cmid)
    if row_taps == 1:
        w1_k = w1_hwio.reshape(1, 9 * Cin, Cmid)
    else:
        w1_k = w1_hwio.reshape(3, 3 * Cin, Cmid)
    w1_k = w1_k.astype(jnp.bfloat16)
    w2_k = c2['w_hwio'].reshape(3, 3 * Cmid, Cout).astype(jnp.bfloat16)
    s1 = c1['scale'].reshape(1, Cmid)
    t1 = c1['shift'].reshape(1, Cmid)
    s2 = c2['scale'].reshape(1, Cout)
    t2 = c2['shift'].reshape(1, Cout)

    # ---- generation-aware VMEM budget -> band height tH (largest divisor of H
    #      that fits, keeping >= 2 grid cells so v7x's 2 TensorCores stay busy).
    try:
        vmem_cap = int(pltpu.get_tpu_info().vmem_capacity_bytes)
    except Exception:
        vmem_cap = 64 * 1024 * 1024              # conservative (v7x per-TC)
    vmem_limit = max(32 * 1024 * 1024,
                     min(int(0.75 * vmem_cap), 127 * 1024 * 1024))
    band_budget = int(0.6 * vmem_limit)

    def _lane(c):
        return _round_up(c, 128)

    def _sub(r):
        return _round_up(r, 8)

    def band_bytes(th):
        lm, lo = (th + 2) * Wq, th * Wq
        x_rows_ = th + 2 * halo
        b = 2 * x_rows_ * Wq * _lane(K1) * 2                  # input blocks (x2 buf, bf16)
        b += 2 * th * Wq * _lane(Cout) * 4                    # output blocks (x2 buf, f32)
        b += 2 * (row_taps * _sub(K1) * _lane(Cmid)
                  + 3 * _sub(3 * Cmid) * _lane(Cout)) * 2     # weights (x2 buf, bf16)
        b += lm * _lane(3 * Cmid) * 2                         # mid3 scratch (bf16)
        b += 3 * lm * _lane(Cmid) * 4 + lo * _lane(Cout) * 4  # live f32 values / spills
        return b

    divisors = sorted((d for d in range(1, H + 1) if H % d == 0), reverse=True)
    if band_rows is not None:
        divisors = [d for d in divisors if d <= band_rows] or [1]
    tH = next((d for d in divisors
               if band_bytes(d) <= band_budget and N * (H // d) >= 2),
              next((d for d in divisors if band_bytes(d) <= band_budget), 1))
    n_bands = H // tH
    x_rows = tH + 2 * halo

    # ---- wrapper-side im2col along kx (or all 9 taps), H-halo pad, band gather.
    xpw = jnp.pad(x_nhwc, ((0, 0), (0, 0), (1, 1), (0, 0)))
    if row_taps == 1:
        xph = jnp.pad(xpw, ((0, 0), (1, 1), (0, 0), (0, 0)))
        taps = [xph[:, ky:ky + H, kx:kx + W, :]
                for ky in range(3) for kx in range(3)]
    else:
        taps = [xpw[:, :, kx:kx + W, :] for kx in range(3)]
    xe = jnp.concatenate(taps, axis=-1)                       # (N, H, W, K1)
    xe = jnp.pad(xe, ((0, 0), (halo, halo), (0, Wq - W), (0, 0)))
    # TODO(synk): for wide Cin, replace this band copy with memory_space=pl.ANY
    # plus a manual halo DMA (no HBM duplication of the input).
    bands = [xe[:, b * tH: b * tH + x_rows] for b in range(n_bands)]
    x_bands = jnp.stack(bands, axis=1).reshape(
        N, n_bands, x_rows * Wq, K1).astype(jnp.bfloat16)

    flops = 2 * N * H * W * 9 * (Cin * Cmid + Cmid * Cout)
    bytes_accessed = int(x_bands.size * 2 + w1_k.size * 2 + w2_k.size * 2
                         + N * H * Wq * Cout * 4)

    kernel = functools.partial(_double_conv_kernel, tH=tH, H=H, W=W, Wq=Wq,
                               row_taps=row_taps)

    out = pl.pallas_call(
        kernel,
        out_shape=jax.ShapeDtypeStruct((N, H, Wq, Cout), jnp.float32),
        grid=(N, n_bands),
        in_specs=[
            pl.BlockSpec((None, None, x_rows * Wq, K1), lambda n, b: (n, b, 0, 0)),
            pl.BlockSpec((row_taps, K1, Cmid), lambda n, b: (0, 0, 0)),
            pl.BlockSpec((1, Cmid), lambda n, b: (0, 0)),
            pl.BlockSpec((1, Cmid), lambda n, b: (0, 0)),
            pl.BlockSpec((3, 3 * Cmid, Cout), lambda n, b: (0, 0, 0)),
            pl.BlockSpec((1, Cout), lambda n, b: (0, 0)),
            pl.BlockSpec((1, Cout), lambda n, b: (0, 0)),
        ],
        out_specs=pl.BlockSpec((None, tH, Wq, Cout), lambda n, b: (n, b, 0, 0)),
        scratch_shapes=[
            pltpu.VMEM(((tH + 2) * Wq, 3 * Cmid), jnp.bfloat16),  # kx-folded mid
        ],
        compiler_params=pltpu.CompilerParams(
            dimension_semantics=("parallel", "parallel"),
            vmem_limit_bytes=vmem_limit,
        ),
        cost_estimate=pl.CostEstimate(flops=flops, transcendentals=0,
                                      bytes_accessed=bytes_accessed),
    )(x_bands, w1_k, s1, t1, w2_k, s2, t2)

    return out[:, :, :W, :]                      # strip W alignment padding


def double_conv_forward(params, x_nchw, *, band_rows=None):
    """PyTorch-layout entry point: (N, Cin, H, W) f32 -> (N, Cout, H, W) f32."""
    x = jnp.transpose(x_nchw, (0, 2, 3, 1))                  # NCHW -> NHWC
    y = double_conv_pallas(x, params, band_rows=band_rows)
    return jnp.transpose(y, (0, 3, 1, 2))                    # NHWC -> NCHW


# ----------------------------------------------------------------------------
# Parameters (deterministic synthetic init; BN folded to scale/shift for kernel)
# ----------------------------------------------------------------------------

def _init_conv_bn(key, cin, cout):
    kw, kb, kg, kbe, km = jax.random.split(key, 5)
    w = jax.random.normal(kw, (3, 3, cin, cout), jnp.float32) / np.sqrt(9.0 * cin)
    b = 0.05 * jax.random.normal(kb, (cout,), jnp.float32)
    gamma = 1.0 + 0.1 * jax.random.normal(kg, (cout,), jnp.float32)
    beta = 0.1 * jax.random.normal(kbe, (cout,), jnp.float32)
    mean = 0.1 * jax.random.normal(km, (cout,), jnp.float32)
    var = jnp.ones((cout,), jnp.float32)
    scale = gamma / jnp.sqrt(var + _BN_EPS)
    shift = beta + (b - mean) * scale
    return {'w_hwio': w, 'scale': scale, 'shift': shift,
            'b': b, 'gamma': gamma, 'beta': beta, 'mean': mean, 'var': var}


def init_double_conv_params(key, in_channels, out_channels, mid_channels=None):
    if not mid_channels:
        mid_channels = out_channels
    k1, k2 = jax.random.split(key)
    return {
        'c1': _init_conv_bn(k1, in_channels, mid_channels),
        'c2': _init_conv_bn(k2, mid_channels, out_channels),
    }


# ----------------------------------------------------------------------------
# Pure-JAX f32 reference (unfolded conv + BN(eval) + ReLU)
# ----------------------------------------------------------------------------

def double_conv_reference(x_nhwc, params):
    def conv_bn_relu(x, p):
        y = lax.conv_general_dilated(
            x, p['w_hwio'], window_strides=(1, 1), padding='SAME',
            dimension_numbers=('NHWC', 'HWIO', 'NHWC'),
            precision=lax.Precision.HIGHEST)
        y = y + p['b']
        y = (y - p['mean']) / jnp.sqrt(p['var'] + _BN_EPS) * p['gamma'] + p['beta']
        return jnp.maximum(y, 0.0)
    return conv_bn_relu(conv_bn_relu(x_nhwc, params['c1']), params['c2'])


# ----------------------------------------------------------------------------
# Main
# ----------------------------------------------------------------------------

if __name__ == "__main__":
    key = jax.random.PRNGKey(0)
    k_param, k_input = jax.random.split(key)

    batch, in_channels, spatial = 2, 4, 16
    out_channels = 32

    params = init_double_conv_params(k_param, in_channels, out_channels)
    x = jax.random.normal(k_input, (batch, in_channels, spatial, spatial),
                          jnp.float32)

    fwd = jax.jit(double_conv_forward)
    out = jax.block_until_ready(fwd(params, x))

    assert out.shape == (batch, out_channels, spatial, spatial), out.shape
    assert out.dtype == jnp.float32
    assert bool(jnp.all(jnp.isfinite(out)))

    # Correctness vs. plain-JAX f32 reference (loose tolerance for bf16 MXU).
    ref = double_conv_reference(jnp.transpose(x, (0, 2, 3, 1)), params)
    ref = jnp.transpose(ref, (0, 3, 1, 2))
    max_err = float(jnp.max(jnp.abs(out - ref)))
    assert max_err < 5e-2, f"max abs err {max_err}"

    print("KERNEL_OK")
</pallas_src>

<mosaic_0001>
module attributes {stable_mosaic.version = 11 : i64} {
  func.func @_double_conv_kernel(%arg0: i32, %arg1: i32, %arg2: memref<1x1x288x36xbf16, #tpu.memory_space<vmem>>, %arg3: memref<1x36x32xbf16, #tpu.memory_space<vmem>>, %arg4: memref<1x32xf32, #tpu.memory_space<vmem>>, %arg5: memref<1x32xf32, #tpu.memory_space<vmem>>, %arg6: memref<3x96x32xbf16, #tpu.memory_space<vmem>>, %arg7: memref<1x32xf32, #tpu.memory_space<vmem>>, %arg8: memref<1x32xf32, #tpu.memory_space<vmem>>, %arg9: memref<1x16x16x32xf32, #tpu.memory_space<vmem>>, %arg10: memref<288x96xbf16, #tpu.memory_space<vmem>>) attributes {dimension_semantics = [#tpu.dimension_semantics<parallel>, #tpu.dimension_semantics<parallel>], iteration_bounds = array<i64: 2, 1>, scalar_prefetch = 0 : i64, scratch_operands = 1 : i64, tpu.core_type = #tpu.core_type<tc>, window_params = [{transform_indices = @transform_0, window_bounds = array<i64: 1, 1, 288, 36>}, {pipeline_mode = #tpu.pipeline_mode<synchronous>, transform_indices = @transform_1, window_bounds = array<i64: 1, 36, 32>}, {pipeline_mode = #tpu.pipeline_mode<synchronous>, transform_indices = @transform_2, window_bounds = array<i64: 1, 32>}, {pipeline_mode = #tpu.pipeline_mode<synchronous>, transform_indices = @transform_3, window_bounds = array<i64: 1, 32>}, {pipeline_mode = #tpu.pipeline_mode<synchronous>, transform_indices = @transform_4, window_bounds = array<i64: 3, 96, 32>}, {pipeline_mode = #tpu.pipeline_mode<synchronous>, transform_indices = @transform_5, window_bounds = array<i64: 1, 32>}, {pipeline_mode = #tpu.pipeline_mode<synchronous>, transform_indices = @transform_6, window_bounds = array<i64: 1, 32>}, {transform_indices = @transform_7, window_bounds = array<i64: 1, 16, 16, 32>}]} {
    %c0 = arith.constant 0 : index
    %c0_0 = arith.constant 0 : index
    %c0_1 = arith.constant 0 : index
    %c0_2 = arith.constant 0 : index
    %0 = vector.load %arg2[%c0, %c0_0, %c0_1, %c0_2] : memref<1x1x288x36xbf16, #tpu.memory_space<vmem>>, vector<1x1x288x36xbf16>
    %1 = vector.shape_cast %0 : vector<1x1x288x36xbf16> to vector<288x36xbf16>
    %c0_3 = arith.constant 0 : index
    %c0_4 = arith.constant 0 : index
    %c0_5 = arith.constant 0 : index
    %2 = vector.load %arg3[%c0_3, %c0_4, %c0_5] : memref<1x36x32xbf16, #tpu.memory_space<vmem>>, vector<1x36x32xbf16>
    %3 = vector.shape_cast %2 : vector<1x36x32xbf16> to vector<36x32xbf16>
    %cst = arith.constant dense<0.000000e+00> : vector<288x32xf32>
    %4 = tpu.matmul %1, %3, %cst {dimension_numbers = #tpu.dot_dimension_numbers<[1], [0], [0], [1], [0, 0, 1, 1], [], []>} : vector<288x36xbf16>, vector<36x32xbf16>, vector<288x32xf32> -> vector<288x32xf32>
    %c0_6 = arith.constant 0 : index
    %c0_7 = arith.constant 0 : index
    %5 = vector.load %arg4[%c0_6, %c0_7] : memref<1x32xf32, #tpu.memory_space<vmem>>, vector<1x32xf32>
    %6 = vector.broadcast %5 : vector<1x32xf32> to vector<288x32xf32>
    %7 = arith.mulf %4, %6 : vector<288x32xf32>
    %c0_8 = arith.constant 0 : index
    %c0_9 = arith.constant 0 : index
    %8 = vector.load %arg5[%c0_8, %c0_9] : memref<1x32xf32, #tpu.memory_space<vmem>>, vector<1x32xf32>
    %9 = vector.broadcast %8 : vector<1x32xf32> to vector<288x32xf32>
    %10 = arith.addf %7, %9 : vector<288x32xf32>
    %cst_10 = arith.constant 0.000000e+00 : f32
    %11 = vector.broadcast %cst_10 : f32 to vector<288x32xf32>
    %12 = arith.maximumf %10, %11 : vector<288x32xf32>
    %13 = vector.shape_cast %12 : vector<288x32xf32> to vector<18x16x32xf32>
    %14 = tpu.iota {dimensions = array<i32: 0>} : vector<18x16x1xi32>
    %15 = tpu.iota {dimensions = array<i32: 1>} : vector<18x16x1xi32>
    %c16_i32 = arith.constant 16 : i32
    %16 = arith.muli %arg1, %c16_i32 : i32
    %c1_i32 = arith.constant 1 : i32
    %17 = arith.subi %16, %c1_i32 : i32
    %18 = vector.broadcast %17 : i32 to vector<18x16x1xi32>
    %19 = arith.addi %18, %14 : vector<18x16x1xi32>
    %c0_i32 = arith.constant 0 : i32
    %20 = vector.broadcast %c0_i32 : i32 to vector<18x16x1xi32>
    %21 = arith.cmpi sge, %19, %20 : vector<18x16x1xi32>
    %c16_i32_11 = arith.constant 16 : i32
    %22 = vector.broadcast %c16_i32_11 : i32 to vector<18x16x1xi32>
    %23 = arith.cmpi slt, %19, %22 : vector<18x16x1xi32>
    %24 = arith.andi %21, %23 : vector<18x16x1xi1>
    %c16_i32_12 = arith.constant 16 : i32
    %25 = vector.broadcast %c16_i32_12 : i32 to vector<18x16x1xi32>
    %26 = arith.cmpi slt, %15, %25 : vector<18x16x1xi32>
    %27 = arith.andi %24, %26 : vector<18x16x1xi1>
    %cst_13 = arith.constant 0.000000e+00 : f32
    %28 = vector.shape_cast %27 : vector<18x16x1xi1> to vector<18x16x1xi1>
    %29 = vector.broadcast %28 : vector<18x16x1xi1> to vector<18x16x32xi1>
    %30 = vector.broadcast %cst_13 : f32 to vector<18x16x32xf32>
    %31 = arith.select %29, %13, %30 : vector<18x16x32xi1>, vector<18x16x32xf32>
    %cst_14 = arith.constant 0.000000e+00 : f32
    %32 = vector.broadcast %cst_14 : f32 to vector<18x1x32xf32>
    %33 = vector.extract_strided_slice %31 {offsets = [0, 0, 0], sizes = [18, 15, 32], strides = [1, 1, 1]} : vector<18x16x32xf32> to vector<18x15x32xf32>
    %34 = tpu.concatenate %32, %33 in 1 : vector<18x1x32xf32>, vector<18x15x32xf32> -> vector<18x16x32xf32>
    %35 = vector.extract_strided_slice %31 {offsets = [0, 1, 0], sizes = [18, 15, 32], strides = [1, 1, 1]} : vector<18x16x32xf32> to vector<18x15x32xf32>
    %36 = tpu.concatenate %35, %32 in 1 : vector<18x15x32xf32>, vector<18x1x32xf32> -> vector<18x16x32xf32>
    %37 = tpu.concatenate %34, %31, %36 in 2 : vector<18x16x32xf32>, vector<18x16x32xf32>, vector<18x16x32xf32> -> vector<18x16x96xf32>
    %38 = vector.shape_cast %37 : vector<18x16x96xf32> to vector<288x96xf32>
    %39 = arith.truncf %38 : vector<288x96xf32> to vector<288x96xbf16>
    %c0_15 = arith.constant 0 : index
    %c0_16 = arith.constant 0 : index
    %40 = vector.load %arg10[%c0_15, %c0_16] : memref<288x96xbf16, #tpu.memory_space<vmem>>, vector<288x96xbf16>
    tpu.vector_store %arg10[%c0_15, %c0_16], %39 {strides = array<i32>} : memref<288x96xbf16, #tpu.memory_space<vmem>>, vector<288x96xbf16>,
    %c0_17 = arith.constant 0 : index
    %c0_18 = arith.constant 0 : index
    %41 = vector.load %arg10[%c0_17, %c0_18] : memref<288x96xbf16, #tpu.memory_space<vmem>>, vector<256x96xbf16>
    %c0_19 = arith.constant 0 : index
    %c0_20 = arith.constant 0 : index
    %c0_21 = arith.constant 0 : index
    %42 = vector.load %arg6[%c0_19, %c0_20, %c0_21] : memref<3x96x32xbf16, #tpu.memory_space<vmem>>, vector<1x96x32xbf16>
    %43 = vector.shape_cast %42 : vector<1x96x32xbf16> to vector<96x32xbf16>
    %cst_22 = arith.constant dense<0.000000e+00> : vector<256x32xf32>
    %44 = tpu.matmul %41, %43, %cst_22 {dimension_numbers = #tpu.dot_dimension_numbers<[1], [0], [0], [1], [0, 0, 1, 1], [], []>} : vector<256x96xbf16>, vector<96x32xbf16>, vector<256x32xf32> -> vector<256x32xf32>
    %c16 = arith.constant 16 : index
    %c0_23 = arith.constant 0 : index
    %45 = vector.load %arg10[%c16, %c0_23] : memref<288x96xbf16, #tpu.memory_space<vmem>>, vector<256x96xbf16>
    %c1 = arith.constant 1 : index
    %c0_24 = arith.constant 0 : index
    %c0_25 = arith.constant 0 : index
    %46 = vector.load %arg6[%c1, %c0_24, %c0_25] : memref<3x96x32xbf16, #tpu.memory_space<vmem>>, vector<1x96x32xbf16>
    %47 = vector.shape_cast %46 : vector<1x96x32xbf16> to vector<96x32xbf16>
    %cst_26 = arith.constant dense<0.000000e+00> : vector<256x32xf32>
    %48 = tpu.matmul %45, %47, %cst_26 {dimension_numbers = #tpu.dot_dimension_numbers<[1], [0], [0], [1], [0, 0, 1, 1], [], []>} : vector<256x96xbf16>, vector<96x32xbf16>, vector<256x32xf32> -> vector<256x32xf32>
    %49 = arith.addf %44, %48 : vector<256x32xf32>
    %c32 = arith.constant 32 : index
    %c0_27 = arith.constant 0 : index
    %50 = vector.load %arg10[%c32, %c0_27] : memref<288x96xbf16, #tpu.memory_space<vmem>>, vector<256x96xbf16>
    %c2 = arith.constant 2 : index
    %c0_28 = arith.constant 0 : index
    %c0_29 = arith.constant 0 : index
    %51 = vector.load %arg6[%c2, %c0_28, %c0_29] : memref<3x96x32xbf16, #tpu.memory_space<vmem>>, vector<1x96x32xbf16>
    %52 = vector.shape_cast %51 : vector<1x96x32xbf16> to vector<96x32xbf16>
    %cst_30 = arith.constant dense<0.000000e+00> : vector<256x32xf32>
    %53 = tpu.matmul %50, %52, %cst_30 {dimension_numbers = #tpu.dot_dimension_numbers<[1], [0], [0], [1], [0, 0, 1, 1], [], []>} : vector<256x96xbf16>, vector<96x32xbf16>, vector<256x32xf32> -> vector<256x32xf32>
    %54 = arith.addf %49, %53 : vector<256x32xf32>
    %c0_31 = arith.constant 0 : index
    %c0_32 = arith.constant 0 : index
    %55 = vector.load %arg7[%c0_31, %c0_32] : memref<1x32xf32, #tpu.memory_space<vmem>>, vector<1x32xf32>
    %56 = vector.broadcast %55 : vector<1x32xf32> to vector<256x32xf32>
    %57 = arith.mulf %54, %56 : vector<256x32xf32>
    %c0_33 = arith.constant 0 : index
    %c0_34 = arith.constant 0 : index
    %58 = vector.load %arg8[%c0_33, %c0_34] : memref<1x32xf32, #tpu.memory_space<vmem>>, vector<1x32xf32>
    %59 = vector.broadcast %58 : vector<1x32xf32> to vector<256x32xf32>
    %60 = arith.addf %57, %59 : vector<256x32xf32>
    %cst_35 = arith.constant 0.000000e+00 : f32
    %61 = vector.broadcast %cst_35 : f32 to vector<256x32xf32>
    %62 = arith.maximumf %60, %61 : vector<256x32xf32>
    %63 = vector.shape_cast %62 : vector<256x32xf32> to vector<16x16x32xf32>
    %c0_36 = arith.constant 0 : index
    %c0_37 = arith.constant 0 : index
    %c0_38 = arith.constant 0 : index
    %c0_39 = arith.constant 0 : index
    %64 = vector.load %arg9[%c0_36, %c0_37, %c0_38, %c0_39] : memref<1x16x16x32xf32, #tpu.memory_space<vmem>>, vector<1x16x16x32xf32>
    %65 = vector.shape_cast %64 : vector<1x16x16x32xf32> to vector<16x16x32xf32>
    %66 = vector.shape_cast %63 : vector<16x16x32xf32> to vector<1x16x16x32xf32>
    tpu.vector_store %arg9[%c0_36, %c0_37, %c0_38, %c0_39], %66 {strides = array<i32>} : memref<1x16x16x32xf32, #tpu.memory_space<vmem>>, vector<1x16x16x32xf32>,
    return
  }
  func.func @transform_0(%arg0: i32, %arg1: i32) -> (i32, i32, i32, i32) {
    %c0_i32 = arith.constant 0 : i32
    %c0_i32_0 = arith.constant 0 : i32
    %c0_i32_1 = arith.constant 0 : i32
    return %arg0, %arg1, %c0_i32, %c0_i32_0 : i32, i32, i32, i32
  }
  func.func @transform_1(%arg0: i32, %arg1: i32) -> (i32, i32, i32) {
    %c0_i32 = arith.constant 0 : i32
    %c0_i32_0 = arith.constant 0 : i32
    %c0_i32_1 = arith.constant 0 : i32
    %c0_i32_2 = arith.constant 0 : i32
    return %c0_i32, %c0_i32_0, %c0_i32_1 : i32, i32, i32
  }
  func.func @transform_2(%arg0: i32, %arg1: i32) -> (i32, i32) {
    %c0_i32 = arith.constant 0 : i32
    %c0_i32_0 = arith.constant 0 : i32
    %c0_i32_1 = arith.constant 0 : i32
    return %c0_i32, %c0_i32_0 : i32, i32
  }
  func.func @transform_3(%arg0: i32, %arg1: i32) -> (i32, i32) {
    %c0_i32 = arith.constant 0 : i32
    %c0_i32_0 = arith.constant 0 : i32
    %c0_i32_1 = arith.constant 0 : i32
    return %c0_i32, %c0_i32_0 : i32, i32
  }
  func.func @transform_4(%arg0: i32, %arg1: i32) -> (i32, i32, i32) {
    %c0_i32 = arith.constant 0 : i32
    %c0_i32_0 = arith.constant 0 : i32
    %c0_i32_1 = arith.constant 0 : i32
    %c0_i32_2 = arith.constant 0 : i32
    return %c0_i32, %c0_i32_0, %c0_i32_1 : i32, i32, i32
  }
  func.func @transform_5(%arg0: i32, %arg1: i32) -> (i32, i32) {
    %c0_i32 = arith.constant 0 : i32
    %c0_i32_0 = arith.constant 0 : i32
    %c0_i32_1 = arith.constant 0 : i32
    return %c0_i32, %c0_i32_0 : i32, i32
  }
  func.func @transform_6(%arg0: i32, %arg1: i32) -> (i32, i32) {
    %c0_i32 = arith.constant 0 : i32
    %c0_i32_0 = arith.constant 0 : i32
    %c0_i32_1 = arith.constant 0 : i32
    return %c0_i32, %c0_i32_0 : i32, i32
  }
  func.func @transform_7(%arg0: i32, %arg1: i32) -> (i32, i32, i32, i32) {
    %c0_i32 = arith.constant 0 : i32
    %c0_i32_0 = arith.constant 0 : i32
    %c0_i32_1 = arith.constant 0 : i32
    return %arg0, %arg1, %c0_i32, %c0_i32_0 : i32, i32, i32, i32
  }
}

</mosaic_0001>

<llo_original>
// kernel: double_conv_forward.1
$region0: #{double_conv_forward.1}
  #allocation0 [shape = 'u32[]', space=smem, size = 0x4, offset = 0x4, fixed_abs, tag = 'smem constant byte address 0x4 - core index']
  #allocation1 [shape = 'u32[72,128]{1,0:T(1,128)}', space=vmem, size = 0x9000, scoped, tag = 'internal scratch']
  #allocation2 [shape = 'bf16[288,96]{1,0:T(8,128)(2,1)}', space=vmem, size = 0x12000, scoped, tag = 'scratch operand']
  %s0 = inlined_call_operand.vmem [shape: bf16[2,1,288,36], index: 0, kind: input, shape index: {}]
  %s1 = inlined_call_operand.vmem [shape: bf16[1,36,32], index: 1, kind: input, shape index: {}]
  %s2 = inlined_call_operand.vmem [shape: f32[1,32], index: 2, kind: input, shape index: {}]
  %s3 = inlined_call_operand.vmem [shape: f32[1,32], index: 3, kind: input, shape index: {}]
  %s4 = inlined_call_operand.vmem [shape: bf16[3,96,32], index: 4, kind: input, shape index: {}]
  %s5 = inlined_call_operand.vmem [shape: f32[1,32], index: 5, kind: input, shape index: {}]
  %s6 = inlined_call_operand.vmem [shape: f32[1,32], index: 6, kind: input, shape index: {}]
  %s7 = inlined_call_operand.hbm [shape: f32[2,16,16,32], index: 7, kind: output, shape index: {}]
  %s8 = sld [smem:[#allocation0]]
  $region61: #{double_conv_forward.1} parent=0
    _
  %s10 = ssub.s32 1, %s8
  %s11 = scalar_select 0, %s10, %s8
  $region1: #{double_conv_forward.1} parent=0
    #allocation3 [shape = 'u8[262144]{0}', space=vmem, size = 0x40000, scoped, tag = 'output window, operand 0']
    #allocation4 [shape = 's32[2]{0}', space=sflag, size = 0x8, scoped, tag = 'scoped memory for double_conv_forward.1']
    %12 = vsyncpa [#allocation4], 0
    %s13 = scalar_lea.sflag [#allocation4], 1
    %14 = vsyncpa %s13, 0
    loop: start=0, step=1, limit=4
    $region2: #{double_conv_forward.1} parent=1 // loop_pre_header
      _
    $region3: #{double_conv_forward.1} parent=1 // loop_header
      %s16 = sphi 0, %s20
      %p17 = scmp.ge.s32.totalorder %s16, 4
      %s23 = sphi 0, %s35
      %s24 = sphi 0, %s31
      %s25 = sphi 0, %s23
      %s26 = sphi 0, %s24
      %s27 = sphi 0, %s25
      %s28 = sphi 0, %s26
      %s40 = sphi 0, %s42
      %s43 = sphi 0, %s40
      %s44 = sphi 0, %s43
      %s60 = sphi 0, %s44
      %s64 = sphi 0, %s64
      %s66 = sphi 0, %s64
      %s67 = sphi 0, %s66
      %s81 = sphi 0, %s67
      %s85 = sphi 0, %s85
      %s87 = sphi 0, %s85
      %s88 = sphi 0, %s87
      %s102 = sphi 0, %s88
      %s106 = sphi 0, %s106
      %s108 = sphi 0, %s106
      %s109 = sphi 0, %s108
      %s123 = sphi 0, %s109
      %s127 = sphi 0, %s127
      %s129 = sphi 0, %s127
      %s130 = sphi 0, %s129
      %s144 = sphi 0, %s130
      %s148 = sphi 0, %s148
      %s150 = sphi 0, %s148
      %s151 = sphi 0, %s150
      %s165 = sphi 0, %s151
      %s169 = sphi 0, %s169
      %s171 = sphi 0, %s169
      %s172 = sphi 0, %s171
      %s186 = sphi 0, %s172
      %s194 = sphi 0, %s196
      %s197 = sphi 0, %s194
      %s198 = sphi 0, %s197
      %s214 = sphi 0, %s198
    $region4: #{double_conv_forward.1} parent=1 // loop_header_branch
      %19 = sbr.rel (%p17) target = $region8
    $region5: #{double_conv_forward.1} parent=1 // loop_body
      %s21 = ssub.s32 %s16, 1
      %s22 = ssub.s32 %s16, 2
      %s29 = sadd.s32 1, %s24
      %p30 = scmp.ge.s32.totalorder %s29, 1
      %s31 = scalar_select %p30, 0, %s29
      %s32 = sadd.s32 1, %s23
      %s33 = scalar_select %p30, %s32, %s23
      %p34 = scmp.ge.s32.totalorder %s33, 2
      %s35 = scalar_select %p34, 0, %s33
      %s36 = ssub.s32 %s23, %s35
      %s37 = ssub.s32 %s24, %s31
      %s38 = sor.u32 %s36, %s37
      %p39 = scmp.eq.s32.totalorder %s38, 0
      %s41 = sadd.s32 %s40, 1
      %s42 = scalar_select %p39, %s40, %s41
      %p45 = pneg %p39
      %p46 = scmp.eq.s32.totalorder %s16, 1
      %p47 = por %p45, %p46
      %p48 = scmp.ne.s32.totalorder %s40, %s43
      %p49 = scmp.eq.s32.totalorder %s16, 0
      %p50 = por %p48, %p49
      %p51 = scmp.ne.s32.totalorder %s40, %s43
      %p52 = scmp.eq.s32.totalorder %s21, 1
      %p53 = por %p51, %p52
      %p54 = scmp.ne.s32.totalorder %s43, %s44
      %p55 = scmp.eq.s32.totalorder %s21, 0
      %p56 = por %p54, %p55
      %p57 = scmp.ne.s32.totalorder %s43, %s44
      %p58 = scmp.eq.s32.totalorder %s22, 1
      %p59 = por %p57, %p58
      %p61 = scmp.ne.s32.totalorder %s44, %s60
      %p62 = scmp.eq.s32.totalorder %s22, 0
      %p63 = por %p61, %p62
      %s65 = sadd.s32 %s64, 1
      %p68 = scmp.eq.s32.totalorder %s16, 1
      %p69 = scmp.ne.s32.totalorder %s64, %s66
      %p70 = scmp.eq.s32.totalorder %s16, 0
      %p71 = por %p69, %p70
      %p72 = scmp.ne.s32.totalorder %s64, %s66
      %p73 = scmp.eq.s32.totalorder %s21, 1
      %p74 = por %p72, %p73
      %p75 = scmp.ne.s32.totalorder %s66, %s67
      %p76 = scmp.eq.s32.totalorder %s21, 0
      %p77 = por %p75, %p76
      %p78 = scmp.ne.s32.totalorder %s66, %s67
      %p79 = scmp.eq.s32.totalorder %s22, 1
      %p80 = por %p78, %p79
      %p82 = scmp.ne.s32.totalorder %s67, %s81
      %p83 = scmp.eq.s32.totalorder %s22, 0
      %p84 = por %p82, %p83
      %s86 = sadd.s32 %s85, 1
      %p89 = scmp.eq.s32.totalorder %s16, 1
      %p90 = scmp.ne.s32.totalorder %s85, %s87
      %p91 = scmp.eq.s32.totalorder %s16, 0
      %p92 = por %p90, %p91
      %p93 = scmp.ne.s32.totalorder %s85, %s87
      %p94 = scmp.eq.s32.totalorder %s21, 1
      %p95 = por %p93, %p94
      %p96 = scmp.ne.s32.totalorder %s87, %s88
      %p97 = scmp.eq.s32.totalorder %s21, 0
      %p98 = por %p96, %p97
      %p99 = scmp.ne.s32.totalorder %s87, %s88
      %p100 = scmp.eq.s32.totalorder %s22, 1
      %p101 = por %p99, %p100
      %p103 = scmp.ne.s32.totalorder %s88, %s102
      %p104 = scmp.eq.s32.totalorder %s22, 0
      %p105 = por %p103, %p104
      %s107 = sadd.s32 %s106, 1
      %p110 = scmp.eq.s32.totalorder %s16, 1
      %p111 = scmp.ne.s32.totalorder %s106, %s108
      %p112 = scmp.eq.s32.totalorder %s16, 0
      %p113 = por %p111, %p112
      %p114 = scmp.ne.s32.totalorder %s106, %s108
      %p115 = scmp.eq.s32.totalorder %s21, 1
      %p116 = por %p114, %p115
      %p117 = scmp.ne.s32.totalorder %s108, %s109
      %p118 = scmp.eq.s32.totalorder %s21, 0
      %p119 = por %p117, %p118
      %p120 = scmp.ne.s32.totalorder %s108, %s109
      %p121 = scmp.eq.s32.totalorder %s22, 1
      %p122 = por %p120, %p121
      %p124 = scmp.ne.s32.totalorder %s109, %s123
      %p125 = scmp.eq.s32.totalorder %s22, 0
      %p126 = por %p124, %p125
      %s128 = sadd.s32 %s127, 1
      %p131 = scmp.eq.s32.totalorder %s16, 1
      %p132 = scmp.ne.s32.totalorder %s127, %s129
      %p133 = scmp.eq.s32.totalorder %s16, 0
      %p134 = por %p132, %p133
      %p135 = scmp.ne.s32.totalorder %s127, %s129
      %p136 = scmp.eq.s32.totalorder %s21, 1
      %p137 = por %p135, %p136
      %p138 = scmp.ne.s32.totalorder %s129, %s130
      %p139 = scmp.eq.s32.totalorder %s21, 0
      %p140 = por %p138, %p139
      %p141 = scmp.ne.s32.totalorder %s129, %s130
      %p142 = scmp.eq.s32.totalorder %s22, 1
      %p143 = por %p141, %p142
      %p145 = scmp.ne.s32.totalorder %s130, %s144
      %p146 = scmp.eq.s32.totalorder %s22, 0
      %p147 = por %p145, %p146
      %s149 = sadd.s32 %s148, 1
      %p152 = scmp.eq.s32.totalorder %s16, 1
      %p153 = scmp.ne.s32.totalorder %s148, %s150
      %p154 = scmp.eq.s32.totalorder %s16, 0
      %p155 = por %p153, %p154
      %p156 = scmp.ne.s32.totalorder %s148, %s150
      %p157 = scmp.eq.s32.totalorder %s21, 1
      %p158 = por %p156, %p157
      %p159 = scmp.ne.s32.totalorder %s150, %s151
      %p160 = scmp.eq.s32.totalorder %s21, 0
      %p161 = por %p159, %p160
      %p162 = scmp.ne.s32.totalorder %s150, %s151
      %p163 = scmp.eq.s32.totalorder %s22, 1
      %p164 = por %p162, %p163
      %p166 = scmp.ne.s32.totalorder %s151, %s165
      %p167 = scmp.eq.s32.totalorder %s22, 0
      %p168 = por %p166, %p167
      %s170 = sadd.s32 %s169, 1
      %p173 = scmp.eq.s32.totalorder %s16, 1
      %p174 = scmp.ne.s32.totalorder %s169, %s171
      %p175 = scmp.eq.s32.totalorder %s16, 0
      %p176 = por %p174, %p175
      %p177 = scmp.ne.s32.totalorder %s169, %s171
      %p178 = scmp.eq.s32.totalorder %s21, 1
      %p179 = por %p177, %p178
      %p180 = scmp.ne.s32.totalorder %s171, %s172
      %p181 = scmp.eq.s32.totalorder %s21, 0
      %p182 = por %p180, %p181
      %p183 = scmp.ne.s32.totalorder %s171, %s172
      %p184 = scmp.eq.s32.totalorder %s22, 1
      %p185 = por %p183, %p184
      %p187 = scmp.ne.s32.totalorder %s172, %s186
      %p188 = scmp.eq.s32.totalorder %s22, 0
      %p189 = por %p187, %p188
      %s190 = ssub.s32 %s23, %s35
      %s191 = ssub.s32 %s24, %s31
      %s192 = sor.u32 %s190, %s191
      %p193 = scmp.eq.s32.totalorder %s192, 0
      %s195 = sadd.s32 %s194, 1
      %s196 = scalar_select %p193, %s194, %s195
      %p199 = pneg %p193
      %p200 = scmp.eq.s32.totalorder %s16, 1
      %p201 = por %p199, %p200
      %p202 = scmp.ne.s32.totalorder %s194, %s197
      %p203 = scmp.eq.s32.totalorder %s16, 0
      %p204 = por %p202, %p203
      %p205 = scmp.ne.s32.totalorder %s194, %s197
      %p206 = scmp.eq.s32.totalorder %s21, 1
      %p207 = por %p205, %p206
      %p208 = scmp.ne.s32.totalorder %s197, %s198
      %p209 = scmp.eq.s32.totalorder %s21, 0
      %p210 = por %p208, %p209
      %p211 = scmp.ne.s32.totalorder %s197, %s198
      %p212 = scmp.eq.s32.totalorder %s22, 1
      %p213 = por %p211, %p212
      %p215 = scmp.ne.s32.totalorder %s198, %s214
      %p216 = scmp.eq.s32.totalorder %s22, 0
      %p217 = por %p215, %p216
      %p218 = scmp.le.s32.totalorder 1, %s16
      %p219 = scmp.lt.s32.totalorder %s16, 3
      %p220 = pnand %p218, %p219
      %p221 = pneg %p220
      // Predicated region
      $region9: #{double_conv_forward.1} parent=5 // pred_check
        _
      $region10: #{double_conv_forward.1} parent=5 // pred_check_branch
        %223 = sbr.rel (%p220) target = $region12
      $region11: #{double_conv_forward.1} parent=5 // pred_region
        %s224 = ssub.s32 %s16, 1
        // Predicated region
        $region13: #{double_conv_forward.1} parent=11 // pred_check
          %p225 = pneg %p77
        $region14: #{double_conv_forward.1} parent=11 // pred_check_branch
          %227 = sbr.rel (%p225) target = $region16
        $region15: #{double_conv_forward.1} parent=11 // pred_region
          _
        $region16: #{double_conv_forward.1} parent=11 // pred_fallthru
          _
        // Predicated region
        $region17: #{double_conv_forward.1} parent=11 // pred_check
          %p228 = pneg %p98
        $region18: #{double_conv_forward.1} parent=11 // pred_check_branch
          %230 = sbr.rel (%p228) target = $region20
        $region19: #{double_conv_forward.1} parent=11 // pred_region
          _
        $region20: #{double_conv_forward.1} parent=11 // pred_fallthru
          _
        // Predicated region
        $region21: #{double_conv_forward.1} parent=11 // pred_check
          %p231 = pneg %p119
        $region22: #{double_conv_forward.1} parent=11 // pred_check_branch
          %233 = sbr.rel (%p231) target = $region24
        $region23: #{double_conv_forward.1} parent=11 // pred_region
          _
        $region24: #{double_conv_forward.1} parent=11 // pred_fallthru
          _
        // Predicated region
        $region25: #{double_conv_forward.1} parent=11 // pred_check
          %p234 = pneg %p140
        $region26: #{double_conv_forward.1} parent=11 // pred_check_branch
          %236 = sbr.rel (%p234) target = $region28
        $region27: #{double_conv_forward.1} parent=11 // pred_region
          _
        $region28: #{double_conv_forward.1} parent=11 // pred_fallthru
          _
        // Predicated region
        $region29: #{double_conv_forward.1} parent=11 // pred_check
          %p237 = pneg %p161
        $region30: #{double_conv_forward.1} parent=11 // pred_check_branch
          %239 = sbr.rel (%p237) target = $region32
        $region31: #{double_conv_forward.1} parent=11 // pred_region
          _
        $region32: #{double_conv_forward.1} parent=11 // pred_fallthru
          _
        // Predicated region
        $region33: #{double_conv_forward.1} parent=11 // pred_check
          %p240 = pneg %p182
        $region34: #{double_conv_forward.1} parent=11 // pred_check_branch
          %242 = sbr.rel (%p240) target = $region36
        $region35: #{double_conv_forward.1} parent=11 // pred_region
          _
        $region36: #{double_conv_forward.1} parent=11 // pred_fallthru
          _
      $region12: #{double_conv_forward.1} parent=5 // pred_fallthru
        _
      %p243 = scmp.lt.s32.totalorder %s16, 2
      // Predicated region
      $region37: #{double_conv_forward.1} parent=5 // pred_check
        %p244 = pneg %p243
      $region38: #{double_conv_forward.1} parent=5 // pred_check_branch
        %246 = sbr.rel (%p244) target = $region40
      $region39: #{double_conv_forward.1} parent=5 // pred_region
        // Predicated region
        $region41: #{double_conv_forward.1} parent=39 // pred_check
          %p247 = pneg %p50
        $region42: #{double_conv_forward.1} parent=39 // pred_check_branch
          %249 = sbr.rel (%p247) target = $region44
        $region43: #{double_conv_forward.1} parent=39 // pred_region
          %p250 = scmp.lt.s32.totalorder %s23, 1
          %s251 = scalar_select %p250, %s23, 1
          %p252 = scmp.lt.s32.totalorder %s24, 0
          %s253 = scalar_select %p252, %s24, 0
          %s254 = smul.addr %s253, 36
          %s255 = smul.addr %s251, 36
          %s256 = sadd.s32 %s254, %s255
          %s257 = smul.addr %s256, 4
          %s258 = scalar_lea.vmem %s0, %s257
        $region44: #{double_conv_forward.1} parent=39 // pred_fallthru
          _
      $region40: #{double_conv_forward.1} parent=5 // pred_fallthru
        _
      %p259 = scmp.le.s32.totalorder 1, %s16
      %p260 = scmp.lt.s32.totalorder %s16, 3
      %p261 = pnand %p259, %p260
      %p262 = pneg %p261
      // Predicated region
      $region45: #{double_conv_forward.1} parent=5 // pred_check
        _
      $region46: #{double_conv_forward.1} parent=5 // pred_check_branch
        %264 = sbr.rel (%p261) target = $region48
      $region47: #{double_conv_forward.1} parent=5 // pred_region
        %s265 = ssub.s32 %s16, 1
        %p266 = scmp.lt.s32.totalorder %s25, 1
        %s267 = scalar_select %p266, %s25, 1
        %p268 = scmp.lt.s32.totalorder %s26, 0
        %s269 = scalar_select %p268, %s26, 0
        %s270 = smul.addr %s269, 36
        %s271 = smul.addr %s267, 36
        %s272 = sadd.s32 %s270, %s271
        %s273 = smul.addr %s272, 4
        %s274 = scalar_lea.vmem %s0, %s273
        %p275 = pneg %p56
        %p276 = pneg %p53
        %p277 = pneg %p77
        %p278 = pneg %p74
        %p279 = pneg %p98
        %p280 = pneg %p95
        %p281 = pneg %p119
        %p282 = pneg %p116
        %p283 = pneg %p140
        %p284 = pneg %p137
        %p285 = pneg %p161
        %p286 = pneg %p158
        %p287 = pneg %p182
        %p288 = pneg %p179
        %p289 = pneg %p210
        %p290 = pneg %p207
        %s291 = sand.u32 %s197, 1
        %s292 = scalar_lea.sflag [#allocation4], %s291
        %s293 = sand.u32 %s197, 1
        %s294 = smul.addr %s293, 256
        %s295 = scalar_lea.vmem [#allocation3], %s294
        %p296 = scmp.lt.s32.totalorder %s25, 1
        %s297 = scalar_select %p296, %s25, 1
        %p298 = scmp.lt.s32.totalorder %s26, 0
        %s299 = scalar_select %p298, %s26, 0
        %s300 = smul.addr %s299, 36
        %s301 = smul.addr %s297, 36
        %s302 = sadd.s32 %s300, %s301
        %s303 = smul.addr %s302, 4
        %s304 = scalar_lea.vmem %s0, %s303
        %s305 = smul.u32 16, %s26
        %v307 = vld [vmem:[%s304] sm:$0xf]
        %v308 = vld [vmem:[%s304 + $0x4] sm:$0xf]
        %v309 = vld [vmem:[%s304 + $0x8] sm:$0xf]
        %v310 = vld [vmem:[%s304 + $0xc] sm:$0xf]
        %v311 = vld [vmem:[%s304 + $0x10] sm:$0xf]
        %v312 = vld [vmem:[%s304 + $0x14] sm:$0xf]
        %v313 = vld [vmem:[%s304 + $0x18] sm:$0xf]
        %v314 = vld [vmem:[%s304 + $0x1c] sm:$0xf]
        %v315 = vld [vmem:[%s304 + $0x20] sm:$0xf]
        %v316 = vld [vmem:[%s304 + $0x24] sm:$0xf]
        %v317 = vld [vmem:[%s304 + $0x28] sm:$0xf]
        %v318 = vld [vmem:[%s304 + $0x2c] sm:$0xf]
        %v319 = vld [vmem:[%s304 + $0x30] sm:$0xf]
        %v320 = vld [vmem:[%s304 + $0x34] sm:$0xf]
        %v321 = vld [vmem:[%s304 + $0x38] sm:$0xf]
        %v322 = vld [vmem:[%s304 + $0x3c] sm:$0xf]
        %v323 = vld [vmem:[%s304 + $0x40] sm:$0xf]
        %v324 = vld [vmem:[%s304 + $0x44] sm:$0xf]
        %v325 = vld [vmem:[%s304 + $0x48] sm:$0xf]
        %v326 = vld [vmem:[%s304 + $0x4c] sm:$0xf]
        %v327 = vld [vmem:[%s304 + $0x50] sm:$0xf]
        %v328 = vld [vmem:[%s304 + $0x54] sm:$0xf]
        %v329 = vld [vmem:[%s304 + $0x58] sm:$0xf]
        %v330 = vld [vmem:[%s304 + $0x5c] sm:$0xf]
        %v331 = vld [vmem:[%s304 + $0x60] sm:$0xf]
        %v332 = vld [vmem:[%s304 + $0x64] sm:$0xf]
        %v333 = vld [vmem:[%s304 + $0x68] sm:$0xf]
        %v334 = vld [vmem:[%s304 + $0x6c] sm:$0xf]
        %v335 = vld [vmem:[%s304 + $0x70] sm:$0xf]
        %v336 = vld [vmem:[%s304 + $0x74] sm:$0xf]
        %v337 = vld [vmem:[%s304 + $0x78] sm:$0xf]
        %v338 = vld [vmem:[%s304 + $0x7c] sm:$0xf]
        %v339 = vld [vmem:[%s304 + $0x80] sm:$0xf]
        %v340 = vld [vmem:[%s304 + $0x84] sm:$0xf]
        %v341 = vld [vmem:[%s304 + $0x88] sm:$0xf]
        %v342 = vld [vmem:[%s304 + $0x8c] sm:$0xf]
        %v343 = vld [vmem:[%s1] sm:$0xf]
        %v344 = vld [vmem:[%s1 + $0x4] sm:$0xf]
        %v345 = vld [vmem:[%s1 + $0x8] sm:$0xf]
        %v346 = vld [vmem:[%s1 + $0xc] sm:$0xf]
        %v347 = vld [vmem:[%s1 + $0x10] sm:$0x3]
        %v384 = vunpack.c.l.b16 %v307
        %v385 = vunpack.c.l.b16 %v308
        %v386 = vunpack.c.l.b16 %v309
        %v387 = vunpack.c.l.b16 %v310
        %v388 = vunpack.c.l.b16 %v311
        %v389 = vunpack.c.l.b16 %v312
        %v390 = vunpack.c.l.b16 %v313
        %v391 = vunpack.c.l.b16 %v314
        %v392 = vunpack.c.l.b16 %v315
        %v393 = vunpack.c.l.b16 %v316
        %v394 = vunpack.c.l.b16 %v317
        %v395 = vunpack.c.l.b16 %v318
        %v396 = vunpack.c.l.b16 %v319
        %v397 = vunpack.c.l.b16 %v320
        %v398 = vunpack.c.l.b16 %v321
        %v399 = vunpack.c.l.b16 %v322
        %v400 = vunpack.c.l.b16 %v323
        %v401 = vunpack.c.l.b16 %v324
        %v402 = vunpack.c.l.b16 %v325
        %v403 = vunpack.c.l.b16 %v326
        %v404 = vunpack.c.l.b16 %v327
        %v405 = vunpack.c.l.b16 %v328
        %v406 = vunpack.c.l.b16 %v329
        %v407 = vunpack.c.l.b16 %v330
        %v408 = vunpack.c.l.b16 %v331
        %v409 = vunpack.c.l.b16 %v332
        %v410 = vunpack.c.l.b16 %v333
        %v411 = vunpack.c.l.b16 %v334
        %v412 = vunpack.c.l.b16 %v335
        %v413 = vunpack.c.l.b16 %v336
        %v414 = vunpack.c.l.b16 %v337
        %v415 = vunpack.c.l.b16 %v338
        %v416 = vunpack.c.l.b16 %v339
        %v417 = vunpack.c.l.b16 %v340
        %v418 = vunpack.c.l.b16 %v341
        %v419 = vunpack.c.l.b16 %v342
        %v420 = vpack.c.b16 %v385, %v384
        %v421 = vpack.c.b16 %v387, %v386
        %v422 = vpack.c.b16 %v389, %v388
        %v423 = vpack.c.b16 %v391, %v390
        %v424 = vpack.c.b16 %v393, %v392
        %v425 = vpack.c.b16 %v395, %v394
        %v426 = vpack.c.b16 %v397, %v396
        %v427 = vpack.c.b16 %v399, %v398
        %v428 = vpack.c.b16 %v401, %v400
        %v429 = vpack.c.b16 %v403, %v402
        %v430 = vpack.c.b16 %v405, %v404
        %v431 = vpack.c.b16 %v407, %v406
        %v432 = vpack.c.b16 %v409, %v408
        %v433 = vpack.c.b16 %v411, %v410
        %v434 = vpack.c.b16 %v413, %v412
        %v435 = vpack.c.b16 %v415, %v414
        %v436 = vpack.c.b16 %v417, %v416
        %v437 = vpack.c.b16 %v419, %v418
        %v443 = vunpack.c.l.b16 %v343
        %v444 = vunpack.c.l.b16 %v344
        %v445 = vunpack.c.l.b16 %v345
        %v446 = vunpack.c.l.b16 %v346
        %v447 = vunpack.c.l.b16 %v347
        %v448 = vpack.c.b16 %v444, %v443
        %v449 = vpack.c.b16 %v446, %v445
        %v450 = vpack.c.b16 %v447, %v447
        %vm453 = vcmask 293888
        %v455 = vsel %vm453, %v420, 0
        %v458 = vsel %vm453, %v421, 0
        %v461 = vsel %vm453, %v422, 0
        %v464 = vsel %vm453, %v423, 0
        %v467 = vsel %vm453, %v424, 0
        %v470 = vsel %vm453, %v425, 0
        %v473 = vsel %vm453, %v426, 0
        %v476 = vsel %vm453, %v427, 0
        %v479 = vsel %vm453, %v428, 0
        %v482 = vsel %vm453, %v429, 0
        %v485 = vsel %vm453, %v430, 0
        %v488 = vsel %vm453, %v431, 0
        %v491 = vsel %vm453, %v432, 0
        %v494 = vsel %vm453, %v433, 0
        %v497 = vsel %vm453, %v434, 0
        %v500 = vsel %vm453, %v435, 0
        %v503 = vsel %vm453, %v436, 0
        %v506 = vsel %vm453, %v437, 0
        %vm508 = vcmask 1041408
        %v510 = vsel %vm508, %v450, 0
        %512 = vmatpush.bf16.msra.mxu0 0
        %513 = vmatpush.bf16.msra.mxu0 0
        %514 = vmatpush.bf16.msra.mxu0 0
        %515 = vmatpush.bf16.msra.mxu0 0
        %516 = vmatpush.bf16.msra.mxu0 0
        %517 = vmatpush.bf16.msra.mxu0 %v510
        %518 = vmatpush.bf16.msra.mxu0 %v449
        %519 = vmatpush.bf16.msra.mxu0 %v448
        %520 = vmatmul.bf16.gmra.mxu0 %v455
        %v521 = vpop.f32.mrf.mxu0
        %v522 = vadd.f32 0.0, %v521
        %v523 = vpop.f32.mrf.mxu0
        %v524 = vadd.f32 0.0, %v523
        %525 = vmatmul.bf16.gmra.mxu0 %v458
        %v526 = vpop.f32.mrf.mxu0
        %v527 = vadd.f32 0.0, %v526
        %v528 = vpop.f32.mrf.mxu0
        %v529 = vadd.f32 0.0, %v528
        %530 = vmatmul.bf16.gmra.mxu0 %v461
        %v531 = vpop.f32.mrf.mxu0
        %v532 = vadd.f32 0.0, %v531
        %v533 = vpop.f32.mrf.mxu0
        %v534 = vadd.f32 0.0, %v533
        %535 = vmatmul.bf16.gmra.mxu0 %v464
        %v536 = vpop.f32.mrf.mxu0
        %v537 = vadd.f32 0.0, %v536
        %v538 = vpop.f32.mrf.mxu0
        %v539 = vadd.f32 0.0, %v538
        %540 = vmatmul.bf16.gmra.mxu0 %v467
        %v541 = vpop.f32.mrf.mxu0
        %v542 = vadd.f32 0.0, %v541
        %v543 = vpop.f32.mrf.mxu0
        %v544 = vadd.f32 0.0, %v543
        %545 = vmatmul.bf16.gmra.mxu0 %v470
        %v546 = vpop.f32.mrf.mxu0
        %v547 = vadd.f32 0.0, %v546
        %v548 = vpop.f32.mrf.mxu0
        %v549 = vadd.f32 0.0, %v548
        %550 = vmatmul.bf16.gmra.mxu0 %v473
        %v551 = vpop.f32.mrf.mxu0
        %v552 = vadd.f32 0.0, %v551
        %v553 = vpop.f32.mrf.mxu0
        %v554 = vadd.f32 0.0, %v553
        %555 = vmatmul.bf16.gmra.mxu0 %v476
        %v556 = vpop.f32.mrf.mxu0
        %v557 = vadd.f32 0.0, %v556
        %v558 = vpop.f32.mrf.mxu0
        %v559 = vadd.f32 0.0, %v558
        %560 = vmatmul.bf16.gmra.mxu0 %v479
        %v561 = vpop.f32.mrf.mxu0
        %v562 = vadd.f32 0.0, %v561
        %v563 = vpop.f32.mrf.mxu0
        %v564 = vadd.f32 0.0, %v563
        %565 = vmatmul.bf16.gmra.mxu0 %v482
        %v566 = vpop.f32.mrf.mxu0
        %v567 = vadd.f32 0.0, %v566
        %v568 = vpop.f32.mrf.mxu0
        %v569 = vadd.f32 0.0, %v568
        %570 = vmatmul.bf16.gmra.mxu0 %v485
        %v571 = vpop.f32.mrf.mxu0
        %v572 = vadd.f32 0.0, %v571
        %v573 = vpop.f32.mrf.mxu0
        %v574 = vadd.f32 0.0, %v573
        %575 = vmatmul.bf16.gmra.mxu0 %v488
        %v576 = vpop.f32.mrf.mxu0
        %v577 = vadd.f32 0.0, %v576
        %v578 = vpop.f32.mrf.mxu0
        %v579 = vadd.f32 0.0, %v578
        %580 = vmatmul.bf16.gmra.mxu0 %v491
        %v581 = vpop.f32.mrf.mxu0
        %v582 = vadd.f32 0.0, %v581
        %v583 = vpop.f32.mrf.mxu0
        %v584 = vadd.f32 0.0, %v583
        %585 = vmatmul.bf16.gmra.mxu0 %v494
        %v586 = vpop.f32.mrf.mxu0
        %v587 = vadd.f32 0.0, %v586
        %v588 = vpop.f32.mrf.mxu0
        %v589 = vadd.f32 0.0, %v588
        %590 = vmatmul.bf16.gmra.mxu0 %v497
        %v591 = vpop.f32.mrf.mxu0
        %v592 = vadd.f32 0.0, %v591
        %v593 = vpop.f32.mrf.mxu0
        %v594 = vadd.f32 0.0, %v593
        %595 = vmatmul.bf16.gmra.mxu0 %v500
        %v596 = vpop.f32.mrf.mxu0
        %v597 = vadd.f32 0.0, %v596
        %v598 = vpop.f32.mrf.mxu0
        %v599 = vadd.f32 0.0, %v598
        %600 = vmatmul.bf16.gmra.mxu0 %v503
        %v601 = vpop.f32.mrf.mxu0
        %v602 = vadd.f32 0.0, %v601
        %v603 = vpop.f32.mrf.mxu0
        %v604 = vadd.f32 0.0, %v603
        %605 = vmatmul.bf16.gmra.mxu0 %v506
        %v606 = vpop.f32.mrf.mxu0
        %v607 = vadd.f32 0.0, %v606
        %v608 = vpop.f32.mrf.mxu0
        %v609 = vadd.f32 0.0, %v608
        %610 = vdwg.mxu0
        %v611 = vld [vmem:[%s2] sm:$0x1]
        %v613 = vperm.slane %v611, 0
        %v615 = vmul.f32 %v522, %v613
        %v616 = vmul.f32 %v524, %v613
        %v617 = vmul.f32 %v527, %v613
        %v618 = vmul.f32 %v529, %v613
        %v619 = vmul.f32 %v532, %v613
        %v620 = vmul.f32 %v534, %v613
        %v621 = vmul.f32 %v537, %v613
        %v622 = vmul.f32 %v539, %v613
        %v623 = vmul.f32 %v542, %v613
        %v624 = vmul.f32 %v544, %v613
        %v625 = vmul.f32 %v547, %v613
        %v626 = vmul.f32 %v549, %v613
        %v627 = vmul.f32 %v552, %v613
        %v628 = vmul.f32 %v554, %v613
        %v629 = vmul.f32 %v557, %v613
        %v630 = vmul.f32 %v559, %v613
        %v631 = vmul.f32 %v562, %v613
        %v632 = vmul.f32 %v564, %v613
        %v633 = vmul.f32 %v567, %v613
        %v634 = vmul.f32 %v569, %v613
        %v635 = vmul.f32 %v572, %v613
        %v636 = vmul.f32 %v574, %v613
        %v637 = vmul.f32 %v577, %v613
        %v638 = vmul.f32 %v579, %v613
        %v639 = vmul.f32 %v582, %v613
        %v640 = vmul.f32 %v584, %v613
        %v641 = vmul.f32 %v587, %v613
        %v642 = vmul.f32 %v589, %v613
        %v643 = vmul.f32 %v592, %v613
        %v644 = vmul.f32 %v594, %v613
        %v645 = vmul.f32 %v597, %v613
        %v646 = vmul.f32 %v599, %v613
        %v647 = vmul.f32 %v602, %v613
        %v648 = vmul.f32 %v604, %v613
        %v649 = vmul.f32 %v607, %v613
        %v650 = vmul.f32 %v609, %v613
        %v651 = vld [vmem:[%s3] sm:$0x1]
        %v653 = vperm.slane %v651, 0
        %v655 = vadd.f32 %v615, %v653
        %v656 = vadd.f32 %v616, %v653
        %v657 = vadd.f32 %v617, %v653
        %v658 = vadd.f32 %v618, %v653
        %v659 = vadd.f32 %v619, %v653
        %v660 = vadd.f32 %v620, %v653
        %v661 = vadd.f32 %v621, %v653
        %v662 = vadd.f32 %v622, %v653
        %v663 = vadd.f32 %v623, %v653
        %v664 = vadd.f32 %v624, %v653
        %v665 = vadd.f32 %v625, %v653
        %v666 = vadd.f32 %v626, %v653
        %v667 = vadd.f32 %v627, %v653
        %v668 = vadd.f32 %v628, %v653
        %v669 = vadd.f32 %v629, %v653
        %v670 = vadd.f32 %v630, %v653
        %v671 = vadd.f32 %v631, %v653
        %v672 = vadd.f32 %v632, %v653
        %v673 = vadd.f32 %v633, %v653
        %v674 = vadd.f32 %v634, %v653
        %v675 = vadd.f32 %v635, %v653
        %v676 = vadd.f32 %v636, %v653
        %v677 = vadd.f32 %v637, %v653
        %v678 = vadd.f32 %v638, %v653
        %v679 = vadd.f32 %v639, %v653
        %v680 = vadd.f32 %v640, %v653
        %v681 = vadd.f32 %v641, %v653
        %v682 = vadd.f32 %v642, %v653
        %v683 = vadd.f32 %v643, %v653
        %v684 = vadd.f32 %v644, %v653
        %v685 = vadd.f32 %v645, %v653
        %v686 = vadd.f32 %v646, %v653
        %v687 = vadd.f32 %v647, %v653
        %v688 = vadd.f32 %v648, %v653
        %v689 = vadd.f32 %v649, %v653
        %v690 = vadd.f32 %v650, %v653
        %v691 = vmax.f32 %v655, 0.0
        %v692 = vmax.f32 %v656, 0.0
        %v693 = vmax.f32 %v657, 0.0
        %v694 = vmax.f32 %v658, 0.0
        %v695 = vmax.f32 %v659, 0.0
        %v696 = vmax.f32 %v660, 0.0
        %v697 = vmax.f32 %v661, 0.0
        %v698 = vmax.f32 %v662, 0.0
        %v699 = vmax.f32 %v663, 0.0
        %v700 = vmax.f32 %v664, 0.0
        %v701 = vmax.f32 %v665, 0.0
        %v702 = vmax.f32 %v666, 0.0
        %v703 = vmax.f32 %v667, 0.0
        %v704 = vmax.f32 %v668, 0.0
        %v705 = vmax.f32 %v669, 0.0
        %v706 = vmax.f32 %v670, 0.0
        %v707 = vmax.f32 %v671, 0.0
        %v708 = vmax.f32 %v672, 0.0
        %v709 = vmax.f32 %v673, 0.0
        %v710 = vmax.f32 %v674, 0.0
        %v711 = vmax.f32 %v675, 0.0
        %v712 = vmax.f32 %v676, 0.0
        %v713 = vmax.f32 %v677, 0.0
        %v714 = vmax.f32 %v678, 0.0
        %v715 = vmax.f32 %v679, 0.0
        %v716 = vmax.f32 %v680, 0.0
        %v717 = vmax.f32 %v681, 0.0
        %v718 = vmax.f32 %v682, 0.0
        %v719 = vmax.f32 %v683, 0.0
        %v720 = vmax.f32 %v684, 0.0
        %v721 = vmax.f32 %v685, 0.0
        %v722 = vmax.f32 %v686, 0.0
        %v723 = vmax.f32 %v687, 0.0
        %v724 = vmax.f32 %v688, 0.0
        %v725 = vmax.f32 %v689, 0.0
        %v726 = vmax.f32 %v690, 0.0
        %v727 = vlaneseq
        %v728 = vshrl.u32 %v727, 7
        %v729 = vadd.s32 %v728, 8
        %s730 = smul.u32 %s26, 16
        %s731 = ssub.s32 %s730, 1
        %v732 = vstv %s731
        %v733 = vadd.s32 %v732, 1
        %v734 = vadd.s32 %v732, 2
        %v735 = vadd.s32 %v732, 3
        %v736 = vadd.s32 %v732, 4
        %v737 = vadd.s32 %v732, 5
        %v738 = vadd.s32 %v732, 6
        %v739 = vadd.s32 %v732, 7
        %v740 = vadd.s32 %v732, 8
        %v741 = vadd.s32 %v732, 9
        %v742 = vadd.s32 %v732, 10
        %v743 = vadd.s32 %v732, 11
        %v744 = vadd.s32 %v732, 12
        %v745 = vadd.s32 %v732, 13
        %v746 = vadd.s32 %v732, 14
        %v747 = vadd.s32 %v732, 15
        %v748 = vadd.s32 %v732, 16
        %v749 = vadd.s32 %v732, 17
        %vm750 = vcmp.ge.s32.totalorder %v732, 0
        %vm751 = vcmp.ge.s32.totalorder %v733, 0
        %vm752 = vcmp.ge.s32.totalorder %v734, 0
        %vm753 = vcmp.ge.s32.totalorder %v735, 0
        %vm754 = vcmp.ge.s32.totalorder %v736, 0
        %vm755 = vcmp.ge.s32.totalorder %v737, 0
        %vm756 = vcmp.ge.s32.totalorder %v738, 0
        %vm757 = vcmp.ge.s32.totalorder %v739, 0
        %vm758 = vcmp.ge.s32.totalorder %v740, 0
        %vm759 = vcmp.ge.s32.totalorder %v741, 0
        %vm760 = vcmp.ge.s32.totalorder %v742, 0
        %vm761 = vcmp.ge.s32.totalorder %v743, 0
        %vm762 = vcmp.ge.s32.totalorder %v744, 0
        %vm763 = vcmp.ge.s32.totalorder %v745, 0
        %vm764 = vcmp.ge.s32.totalorder %v746, 0
        %vm765 = vcmp.ge.s32.totalorder %v747, 0
        %vm766 = vcmp.ge.s32.totalorder %v748, 0
        %vm767 = vcmp.ge.s32.totalorder %v749, 0
        %vm768 = vcmp.lt.s32.totalorder %v732, 16
        %vm769 = vcmp.lt.s32.totalorder %v733, 16
        %vm770 = vcmp.lt.s32.totalorder %v734, 16
        %vm771 = vcmp.lt.s32.totalorder %v735, 16
        %vm772 = vcmp.lt.s32.totalorder %v736, 16
        %vm773 = vcmp.lt.s32.totalorder %v737, 16
        %vm774 = vcmp.lt.s32.totalorder %v738, 16
        %vm775 = vcmp.lt.s32.totalorder %v739, 16
        %vm776 = vcmp.lt.s32.totalorder %v740, 16
        %vm777 = vcmp.lt.s32.totalorder %v741, 16
        %vm778 = vcmp.lt.s32.totalorder %v742, 16
        %vm779 = vcmp.lt.s32.totalorder %v743, 16
        %vm780 = vcmp.lt.s32.totalorder %v744, 16
        %vm781 = vcmp.lt.s32.totalorder %v745, 16
        %vm782 = vcmp.lt.s32.totalorder %v746, 16
        %vm783 = vcmp.lt.s32.totalorder %v747, 16
        %vm784 = vcmp.lt.s32.totalorder %v748, 16
        %vm785 = vcmp.lt.s32.totalorder %v749, 16
        %vm786 = vmand %vm750, %vm768
        %vm787 = vmand %vm751, %vm769
        %vm788 = vmand %vm752, %vm770
        %vm789 = vmand %vm753, %vm771
        %vm790 = vmand %vm754, %vm772
        %vm791 = vmand %vm755, %vm773
        %vm792 = vmand %vm756, %vm774
        %vm793 = vmand %vm757, %vm775
        %vm794 = vmand %vm758, %vm776
        %vm795 = vmand %vm759, %vm777
        %vm796 = vmand %vm760, %vm778
        %vm797 = vmand %vm761, %vm779
        %vm798 = vmand %vm762, %vm780
        %vm799 = vmand %vm763, %vm781
        %vm800 = vmand %vm764, %vm782
        %vm801 = vmand %vm765, %vm783
        %vm802 = vmand %vm766, %vm784
        %vm803 = vmand %vm767, %vm785
        %vm804 = vcmp.lt.s32.totalorder %v728, 16
        %vm805 = vcmp.lt.s32.totalorder %v729, 16
        %vm806 = vmand %vm786, %vm804
        %vm807 = vmand %vm786, %vm805
        %vm808 = vmand %vm787, %vm804
        %vm809 = vmand %vm787, %vm805
        %vm810 = vmand %vm788, %vm804
        %vm811 = vmand %vm788, %vm805
        %vm812 = vmand %vm789, %vm804
        %vm813 = vmand %vm789, %vm805
        %vm814 = vmand %vm790, %vm804
        %vm815 = vmand %vm790, %vm805
        %vm816 = vmand %vm791, %vm804
        %vm817 = vmand %vm791, %vm805
        %vm818 = vmand %vm792, %vm804
        %vm819 = vmand %vm792, %vm805
        %vm820 = vmand %vm793, %vm804
        %vm821 = vmand %vm793, %vm805
        %vm822 = vmand %vm794, %vm804
        %vm823 = vmand %vm794, %vm805
        %vm824 = vmand %vm795, %vm804
        %vm825 = vmand %vm795, %vm805
        %vm826 = vmand %vm796, %vm804
        %vm827 = vmand %vm796, %vm805
        %vm828 = vmand %vm797, %vm804
        %vm829 = vmand %vm797, %vm805
        %vm830 = vmand %vm798, %vm804
        %vm831 = vmand %vm798, %vm805
        %vm832 = vmand %vm799, %vm804
        %vm833 = vmand %vm799, %vm805
        %vm834 = vmand %vm800, %vm804
        %vm835 = vmand %vm800, %vm805
        %vm836 = vmand %vm801, %vm804
        %vm837 = vmand %vm801, %vm805
        %vm838 = vmand %vm802, %vm804
        %vm839 = vmand %vm802, %vm805
        %vm840 = vmand %vm803, %vm804
        %vm841 = vmand %vm803, %vm805
        %v842 = vsel %vm806, 1, 0
        %v843 = vsel %vm807, 1, 0
        %v844 = vsel %vm808, 1, 0
        %v845 = vsel %vm809, 1, 0
        %v846 = vsel %vm810, 1, 0
        %v847 = vsel %vm811, 1, 0
        %v848 = vsel %vm812, 1, 0
        %v849 = vsel %vm813, 1, 0
        %v850 = vsel %vm814, 1, 0
        %v851 = vsel %vm815, 1, 0
        %v852 = vsel %vm816, 1, 0
        %v853 = vsel %vm817, 1, 0
        %v854 = vsel %vm818, 1, 0
        %v855 = vsel %vm819, 1, 0
        %v856 = vsel %vm820, 1, 0
        %v857 = vsel %vm821, 1, 0
        %v858 = vsel %vm822, 1, 0
        %v859 = vsel %vm823, 1, 0
        %v860 = vsel %vm824, 1, 0
        %v861 = vsel %vm825, 1, 0
        %v862 = vsel %vm826, 1, 0
        %v863 = vsel %vm827, 1, 0
        %v864 = vsel %vm828, 1, 0
        %v865 = vsel %vm829, 1, 0
        %v866 = vsel %vm830, 1, 0
        %v867 = vsel %vm831, 1, 0
        %v868 = vsel %vm832, 1, 0
        %v869 = vsel %vm833, 1, 0
        %v870 = vsel %vm834, 1, 0
        %v871 = vsel %vm835, 1, 0
        %v872 = vsel %vm836, 1, 0
        %v873 = vsel %vm837, 1, 0
        %v874 = vsel %vm838, 1, 0
        %v875 = vsel %vm839, 1, 0
        %v876 = vsel %vm840, 1, 0
        %v877 = vsel %vm841, 1, 0
        %vm878 = vcmp.eq.s32.totalorder %v842, 1
        %vm879 = vcmp.eq.s32.totalorder %v843, 1
        %vm880 = vcmp.eq.s32.totalorder %v844, 1
        %vm881 = vcmp.eq.s32.totalorder %v845, 1
        %vm882 = vcmp.eq.s32.totalorder %v846, 1
        %vm883 = vcmp.eq.s32.totalorder %v847, 1
        %vm884 = vcmp.eq.s32.totalorder %v848, 1
        %vm885 = vcmp.eq.s32.totalorder %v849, 1
        %vm886 = vcmp.eq.s32.totalorder %v850, 1
        %vm887 = vcmp.eq.s32.totalorder %v851, 1
        %vm888 = vcmp.eq.s32.totalorder %v852, 1
        %vm889 = vcmp.eq.s32.totalorder %v853, 1
        %vm890 = vcmp.eq.s32.totalorder %v854, 1
        %vm891 = vcmp.eq.s32.totalorder %v855, 1
        %vm892 = vcmp.eq.s32.totalorder %v856, 1
        %vm893 = vcmp.eq.s32.totalorder %v857, 1
        %vm894 = vcmp.eq.s32.totalorder %v858, 1
        %vm895 = vcmp.eq.s32.totalorder %v859, 1
        %vm896 = vcmp.eq.s32.totalorder %v860, 1
        %vm897 = vcmp.eq.s32.totalorder %v861, 1
        %vm898 = vcmp.eq.s32.totalorder %v862, 1
        %vm899 = vcmp.eq.s32.totalorder %v863, 1
        %vm900 = vcmp.eq.s32.totalorder %v864, 1
        %vm901 = vcmp.eq.s32.totalorder %v865, 1
        %vm902 = vcmp.eq.s32.totalorder %v866, 1
        %vm903 = vcmp.eq.s32.totalorder %v867, 1
        %vm904 = vcmp.eq.s32.totalorder %v868, 1
        %vm905 = vcmp.eq.s32.totalorder %v869, 1
        %vm906 = vcmp.eq.s32.totalorder %v870, 1
        %vm907 = vcmp.eq.s32.totalorder %v871, 1
        %vm908 = vcmp.eq.s32.totalorder %v872, 1
        %vm909 = vcmp.eq.s32.totalorder %v873, 1
        %vm910 = vcmp.eq.s32.totalorder %v874, 1
        %vm911 = vcmp.eq.s32.totalorder %v875, 1
        %vm912 = vcmp.eq.s32.totalorder %v876, 1
        %vm913 = vcmp.eq.s32.totalorder %v877, 1
        %v914 = vsel %vm878, %v691, 0.0
        %v915 = vsel %vm879, %v692, 0.0
        %v916 = vsel %vm880, %v693, 0.0
        %v917 = vsel %vm881, %v694, 0.0
        %v918 = vsel %vm882, %v695, 0.0
        %v919 = vsel %vm883, %v696, 0.0
        %v920 = vsel %vm884, %v697, 0.0
        %v921 = vsel %vm885, %v698, 0.0
        %v922 = vsel %vm886, %v699, 0.0
        %v923 = vsel %vm887, %v700, 0.0
        %v924 = vsel %vm888, %v701, 0.0
        %v925 = vsel %vm889, %v702, 0.0
        %v926 = vsel %vm890, %v703, 0.0
        %v927 = vsel %vm891, %v704, 0.0
        %v928 = vsel %vm892, %v705, 0.0
        %v929 = vsel %vm893, %v706, 0.0
        %v930 = vsel %vm894, %v707, 0.0
        %v931 = vsel %vm895, %v708, 0.0
        %v932 = vsel %vm896, %v709, 0.0
        %v933 = vsel %vm897, %v710, 0.0
        %v934 = vsel %vm898, %v711, 0.0
        %v935 = vsel %vm899, %v712, 0.0
        %v936 = vsel %vm900, %v713, 0.0
        %v937 = vsel %vm901, %v714, 0.0
        %v938 = vsel %vm902, %v715, 0.0
        %v939 = vsel %vm903, %v716, 0.0
        %v940 = vsel %vm904, %v717, 0.0
        %v941 = vsel %vm905, %v718, 0.0
        %v942 = vsel %vm906, %v719, 0.0
        %v943 = vsel %vm907, %v720, 0.0
        %v944 = vsel %vm908, %v721, 0.0
        %v945 = vsel %vm909, %v722, 0.0
        %v946 = vsel %vm910, %v723, 0.0
        %v947 = vsel %vm911, %v724, 0.0
        %v948 = vsel %vm912, %v725, 0.0
        %v949 = vsel %vm913, %v726, 0.0
        %vm986 = vcmask 1040384
        %v987 = vrot.slane %v914, 7
        %v988 = vrot.slane %v915, 7
        %v989 = vsel %vm986, %v987, %v988
        %v990 = vrot.slane %v916, 7
        %v991 = vrot.slane %v917, 7
        %v992 = vsel %vm986, %v990, %v991
        %v993 = vrot.slane %v918, 7
        %v994 = vrot.slane %v919, 7
        %v995 = vsel %vm986, %v993, %v994
        %v996 = vrot.slane %v920, 7
        %v997 = vrot.slane %v921, 7
        %v998 = vsel %vm986, %v996, %v997
        %v999 = vrot.slane %v922, 7
        %v1000 = vrot.slane %v923, 7
        %v1001 = vsel %vm986, %v999, %v1000
        %v1002 = vrot.slane %v924, 7
        %v1003 = vrot.slane %v925, 7
        %v1004 = vsel %vm986, %v1002, %v1003
        %v1005 = vrot.slane %v926, 7
        %v1006 = vrot.slane %v927, 7
        %v1007 = vsel %vm986, %v1005, %v1006
        %v1008 = vrot.slane %v928, 7
        %v1009 = vrot.slane %v929, 7
        %v1010 = vsel %vm986, %v1008, %v1009
        %v1011 = vrot.slane %v930, 7
        %v1012 = vrot.slane %v931, 7
        %v1013 = vsel %vm986, %v1011, %v1012
        %v1014 = vrot.slane %v932, 7
        %v1015 = vrot.slane %v933, 7
        %v1016 = vsel %vm986, %v1014, %v1015
        %v1017 = vrot.slane %v934, 7
        %v1018 = vrot.slane %v935, 7
        %v1019 = vsel %vm986, %v1017, %v1018
        %v1020 = vrot.slane %v936, 7
        %v1021 = vrot.slane %v937, 7
        %v1022 = vsel %vm986, %v1020, %v1021
        %v1023 = vrot.slane %v938, 7
        %v1024 = vrot.slane %v939, 7
        %v1025 = vsel %vm986, %v1023, %v1024
        %v1026 = vrot.slane %v940, 7
        %v1027 = vrot.slane %v941, 7
        %v1028 = vsel %vm986, %v1026, %v1027
        %v1029 = vrot.slane %v942, 7
        %v1030 = vrot.slane %v943, 7
        %v1031 = vsel %vm986, %v1029, %v1030
        %v1032 = vrot.slane %v944, 7
        %v1033 = vrot.slane %v945, 7
        %v1034 = vsel %vm986, %v1032, %v1033
        %v1035 = vrot.slane %v946, 7
        %v1036 = vrot.slane %v947, 7
        %v1037 = vsel %vm986, %v1035, %v1036
        %v1038 = vrot.slane %v948, 7
        %v1039 = vrot.slane %v949, 7
        %v1040 = vsel %vm986, %v1038, %v1039
        %v1077 = vsel %vm986, 0.0, %v987
        %v1078 = vsel %vm986, 0.0, %v990
        %v1079 = vsel %vm986, 0.0, %v993
        %v1080 = vsel %vm986, 0.0, %v996
        %v1081 = vsel %vm986, 0.0, %v999
        %v1082 = vsel %vm986, 0.0, %v1002
        %v1083 = vsel %vm986, 0.0, %v1005
        %v1084 = vsel %vm986, 0.0, %v1008
        %v1085 = vsel %vm986, 0.0, %v1011
        %v1086 = vsel %vm986, 0.0, %v1014
        %v1087 = vsel %vm986, 0.0, %v1017
        %v1088 = vsel %vm986, 0.0, %v1020
        %v1089 = vsel %vm986, 0.0, %v1023
        %v1090 = vsel %vm986, 0.0, %v1026
        %v1091 = vsel %vm986, 0.0, %v1029
        %v1092 = vsel %vm986, 0.0, %v1032
        %v1093 = vsel %vm986, 0.0, %v1035
        %v1094 = vsel %vm986, 0.0, %v1038
        %vm1095 = vcmask 1046528
        %v1096 = vrot.slane %v914, 1
        %v1097 = vrot.slane %v915, 1
        %v1098 = vsel %vm1095, %v1096, %v1097
        %v1099 = vrot.slane %v916, 1
        %v1100 = vrot.slane %v917, 1
        %v1101 = vsel %vm1095, %v1099, %v1100
        %v1102 = vrot.slane %v918, 1
        %v1103 = vrot.slane %v919, 1
        %v1104 = vsel %vm1095, %v1102, %v1103
        %v1105 = vrot.slane %v920, 1
        %v1106 = vrot.slane %v921, 1
        %v1107 = vsel %vm1095, %v1105, %v1106
        %v1108 = vrot.slane %v922, 1
        %v1109 = vrot.slane %v923, 1
        %v1110 = vsel %vm1095, %v1108, %v1109
        %v1111 = vrot.slane %v924, 1
        %v1112 = vrot.slane %v925, 1
        %v1113 = vsel %vm1095, %v1111, %v1112
        %v1114 = vrot.slane %v926, 1
        %v1115 = vrot.slane %v927, 1
        %v1116 = vsel %vm1095, %v1114, %v1115
        %v1117 = vrot.slane %v928, 1
        %v1118 = vrot.slane %v929, 1
        %v1119 = vsel %vm1095, %v1117, %v1118
        %v1120 = vrot.slane %v930, 1
        %v1121 = vrot.slane %v931, 1
        %v1122 = vsel %vm1095, %v1120, %v1121
        %v1123 = vrot.slane %v932, 1
        %v1124 = vrot.slane %v933, 1
        %v1125 = vsel %vm1095, %v1123, %v1124
        %v1126 = vrot.slane %v934, 1
        %v1127 = vrot.slane %v935, 1
        %v1128 = vsel %vm1095, %v1126, %v1127
        %v1129 = vrot.slane %v936, 1
        %v1130 = vrot.slane %v937, 1
        %v1131 = vsel %vm1095, %v1129, %v1130
        %v1132 = vrot.slane %v938, 1
        %v1133 = vrot.slane %v939, 1
        %v1134 = vsel %vm1095, %v1132, %v1133
        %v1135 = vrot.slane %v940, 1
        %v1136 = vrot.slane %v941, 1
        %v1137 = vsel %vm1095, %v1135, %v1136
        %v1138 = vrot.slane %v942, 1
        %v1139 = vrot.slane %v943, 1
        %v1140 = vsel %vm1095, %v1138, %v1139
        %v1141 = vrot.slane %v944, 1
        %v1142 = vrot.slane %v945, 1
        %v1143 = vsel %vm1095, %v1141, %v1142
        %v1144 = vrot.slane %v946, 1
        %v1145 = vrot.slane %v947, 1
        %v1146 = vsel %vm1095, %v1144, %v1145
        %v1147 = vrot.slane %v948, 1
        %v1148 = vrot.slane %v949, 1
        %v1149 = vsel %vm1095, %v1147, %v1148
        %v1168 = vsel %vm1095, %v1097, 0.0
        %v1169 = vsel %vm1095, %v1100, 0.0
        %v1170 = vsel %vm1095, %v1103, 0.0
        %v1171 = vsel %vm1095, %v1106, 0.0
        %v1172 = vsel %vm1095, %v1109, 0.0
        %v1173 = vsel %vm1095, %v1112, 0.0
        %v1174 = vsel %vm1095, %v1115, 0.0
        %v1175 = vsel %vm1095, %v1118, 0.0
        %v1176 = vsel %vm1095, %v1121, 0.0
        %v1177 = vsel %vm1095, %v1124, 0.0
        %v1178 = vsel %vm1095, %v1127, 0.0
        %v1179 = vsel %vm1095, %v1130, 0.0
        %v1180 = vsel %vm1095, %v1133, 0.0
        %v1181 = vsel %vm1095, %v1136, 0.0
        %v1182 = vsel %vm1095, %v1139, 0.0
        %v1183 = vsel %vm1095, %v1142, 0.0
        %v1184 = vsel %vm1095, %v1145, 0.0
        %v1185 = vsel %vm1095, %v1148, 0.0
        %1186 = vrot.lane.b32.xlu0 %v914, 32
        %v1187 = vpop.permute.xlu0 %1186
        %1188 = vrot.lane.b32.xlu0 %v915, 32
        %v1189 = vpop.permute.xlu0 %1188
        %1190 = vrot.lane.b32.xlu0 %v916, 32
        %v1191 = vpop.permute.xlu0 %1190
        %1192 = vrot.lane.b32.xlu0 %v917, 32
        %v1193 = vpop.permute.xlu0 %1192
        %1194 = vrot.lane.b32.xlu0 %v918, 32
        %v1195 = vpop.permute.xlu0 %1194
        %1196 = vrot.lane.b32.xlu0 %v919, 32
        %v1197 = vpop.permute.xlu0 %1196
        %1198 = vrot.lane.b32.xlu0 %v920, 32
        %v1199 = vpop.permute.xlu0 %1198
        %1200 = vrot.lane.b32.xlu0 %v921, 32
        %v1201 = vpop.permute.xlu0 %1200
        %1202 = vrot.lane.b32.xlu0 %v922, 32
        %v1203 = vpop.permute.xlu0 %1202
        %1204 = vrot.lane.b32.xlu0 %v923, 32
        %v1205 = vpop.permute.xlu0 %1204
        %1206 = vrot.lane.b32.xlu0 %v924, 32
        %v1207 = vpop.permute.xlu0 %1206
        %1208 = vrot.lane.b32.xlu0 %v925, 32
        %v1209 = vpop.permute.xlu0 %1208
        %1210 = vrot.lane.b32.xlu0 %v926, 32
        %v1211 = vpop.permute.xlu0 %1210
        %1212 = vrot.lane.b32.xlu0 %v927, 32
        %v1213 = vpop.permute.xlu0 %1212
        %1214 = vrot.lane.b32.xlu0 %v928, 32
        %v1215 = vpop.permute.xlu0 %1214
        %1216 = vrot.lane.b32.xlu0 %v929, 32
        %v1217 = vpop.permute.xlu0 %1216
        %1218 = vrot.lane.b32.xlu0 %v930, 32
        %v1219 = vpop.permute.xlu0 %1218
        %1220 = vrot.lane.b32.xlu0 %v931, 32
        %v1221 = vpop.permute.xlu0 %1220
        %1222 = vrot.lane.b32.xlu0 %v932, 32
        %v1223 = vpop.permute.xlu0 %1222
        %1224 = vrot.lane.b32.xlu0 %v933, 32
        %v1225 = vpop.permute.xlu0 %1224
        %1226 = vrot.lane.b32.xlu0 %v934, 32
        %v1227 = vpop.permute.xlu0 %1226
        %1228 = vrot.lane.b32.xlu0 %v935, 32
        %v1229 = vpop.permute.xlu0 %1228
        %1230 = vrot.lane.b32.xlu0 %v936, 32
        %v1231 = vpop.permute.xlu0 %1230
        %1232 = vrot.lane.b32.xlu0 %v937, 32
        %v1233 = vpop.permute.xlu0 %1232
        %1234 = vrot.lane.b32.xlu0 %v938, 32
        %v1235 = vpop.permute.xlu0 %1234
        %1236 = vrot.lane.b32.xlu0 %v939, 32
        %v1237 = vpop.permute.xlu0 %1236
        %1238 = vrot.lane.b32.xlu0 %v940, 32
        %v1239 = vpop.permute.xlu0 %1238
        %1240 = vrot.lane.b32.xlu0 %v941, 32
        %v1241 = vpop.permute.xlu0 %1240
        %1242 = vrot.lane.b32.xlu0 %v942, 32
        %v1243 = vpop.permute.xlu0 %1242
        %1244 = vrot.lane.b32.xlu0 %v943, 32
        %v1245 = vpop.permute.xlu0 %1244
        %1246 = vrot.lane.b32.xlu0 %v944, 32
        %v1247 = vpop.permute.xlu0 %1246
        %1248 = vrot.lane.b32.xlu0 %v945, 32
        %v1249 = vpop.permute.xlu0 %1248
        %1250 = vrot.lane.b32.xlu0 %v946, 32
        %v1251 = vpop.permute.xlu0 %1250
        %1252 = vrot.lane.b32.xlu0 %v947, 32
        %v1253 = vpop.permute.xlu0 %1252
        %1254 = vrot.lane.b32.xlu0 %v948, 32
        %v1255 = vpop.permute.xlu0 %1254
        %1256 = vrot.lane.b32.xlu0 %v949, 32
        %v1257 = vpop.permute.xlu0 %1256
        %1312 = vrot.lane.b32.xlu0 %v1098, 64
        %v1313 = vpop.permute.xlu0 %1312
        %1314 = vrot.lane.b32.xlu0 %v1168, 64
        %v1315 = vpop.permute.xlu0 %1314
        %1316 = vrot.lane.b32.xlu0 %v1101, 64
        %v1317 = vpop.permute.xlu0 %1316
        %1318 = vrot.lane.b32.xlu0 %v1169, 64
        %v1319 = vpop.permute.xlu0 %1318
        %1320 = vrot.lane.b32.xlu0 %v1104, 64
        %v1321 = vpop.permute.xlu0 %1320
        %1322 = vrot.lane.b32.xlu0 %v1170, 64
        %v1323 = vpop.permute.xlu0 %1322
        %1324 = vrot.lane.b32.xlu0 %v1107, 64
        %v1325 = vpop.permute.xlu0 %1324
        %1326 = vrot.lane.b32.xlu0 %v1171, 64
        %v1327 = vpop.permute.xlu0 %1326
        %1328 = vrot.lane.b32.xlu0 %v1110, 64
        %v1329 = vpop.permute.xlu0 %1328
        %1330 = vrot.lane.b32.xlu0 %v1172, 64
        %v1331 = vpop.permute.xlu0 %1330
        %1332 = vrot.lane.b32.xlu0 %v1113, 64
        %v1333 = vpop.permute.xlu0 %1332
        %1334 = vrot.lane.b32.xlu0 %v1173, 64
        %v1335 = vpop.permute.xlu0 %1334
        %1336 = vrot.lane.b32.xlu0 %v1116, 64
        %v1337 = vpop.permute.xlu0 %1336
        %1338 = vrot.lane.b32.xlu0 %v1174, 64
        %v1339 = vpop.permute.xlu0 %1338
        %1340 = vrot.lane.b32.xlu0 %v1119, 64
        %v1341 = vpop.permute.xlu0 %1340
        %1342 = vrot.lane.b32.xlu0 %v1175, 64
        %v1343 = vpop.permute.xlu0 %1342
        %1344 = vrot.lane.b32.xlu0 %v1122, 64
        %v1345 = vpop.permute.xlu0 %1344
        %1346 = vrot.lane.b32.xlu0 %v1176, 64
        %v1347 = vpop.permute.xlu0 %1346
        %1348 = vrot.lane.b32.xlu0 %v1125, 64
        %v1349 = vpop.permute.xlu0 %1348
        %1350 = vrot.lane.b32.xlu0 %v1177, 64
        %v1351 = vpop.permute.xlu0 %1350
        %1352 = vrot.lane.b32.xlu0 %v1128, 64
        %v1353 = vpop.permute.xlu0 %1352
        %1354 = vrot.lane.b32.xlu0 %v1178, 64
        %v1355 = vpop.permute.xlu0 %1354
        %1356 = vrot.lane.b32.xlu0 %v1131, 64
        %v1357 = vpop.permute.xlu0 %1356
        %1358 = vrot.lane.b32.xlu0 %v1179, 64
        %v1359 = vpop.permute.xlu0 %1358
        %1360 = vrot.lane.b32.xlu0 %v1134, 64
        %v1361 = vpop.permute.xlu0 %1360
        %1362 = vrot.lane.b32.xlu0 %v1180, 64
        %v1363 = vpop.permute.xlu0 %1362
        %1364 = vrot.lane.b32.xlu0 %v1137, 64
        %v1365 = vpop.permute.xlu0 %1364
        %1366 = vrot.lane.b32.xlu0 %v1181, 64
        %v1367 = vpop.permute.xlu0 %1366
        %1368 = vrot.lane.b32.xlu0 %v1140, 64
        %v1369 = vpop.permute.xlu0 %1368
        %1370 = vrot.lane.b32.xlu0 %v1182, 64
        %v1371 = vpop.permute.xlu0 %1370
        %1372 = vrot.lane.b32.xlu0 %v1143, 64
        %v1373 = vpop.permute.xlu0 %1372
        %1374 = vrot.lane.b32.xlu0 %v1183, 64
        %v1375 = vpop.permute.xlu0 %1374
        %1376 = vrot.lane.b32.xlu0 %v1146, 64
        %v1377 = vpop.permute.xlu0 %1376
        %1378 = vrot.lane.b32.xlu0 %v1184, 64
        %v1379 = vpop.permute.xlu0 %1378
        %1380 = vrot.lane.b32.xlu0 %v1149, 64
        %v1381 = vpop.permute.xlu0 %1380
        %1382 = vrot.lane.b32.xlu0 %v1185, 64
        %v1383 = vpop.permute.xlu0 %1382
        %vm1420 = vcmask 261120
        %v1421 = vsel %vm1420, %v1077, %v1187
        %v1422 = vsel %vm1420, %v989, %v1189
        %v1423 = vsel %vm1420, %v1078, %v1191
        %v1424 = vsel %vm1420, %v992, %v1193
        %v1425 = vsel %vm1420, %v1079, %v1195
        %v1426 = vsel %vm1420, %v995, %v1197
        %v1427 = vsel %vm1420, %v1080, %v1199
        %v1428 = vsel %vm1420, %v998, %v1201
        %v1429 = vsel %vm1420, %v1081, %v1203
        %v1430 = vsel %vm1420, %v1001, %v1205
        %v1431 = vsel %vm1420, %v1082, %v1207
        %v1432 = vsel %vm1420, %v1004, %v1209
        %v1433 = vsel %vm1420, %v1083, %v1211
        %v1434 = vsel %vm1420, %v1007, %v1213
        %v1435 = vsel %vm1420, %v1084, %v1215
        %v1436 = vsel %vm1420, %v1010, %v1217
        %v1437 = vsel %vm1420, %v1085, %v1219
        %v1438 = vsel %vm1420, %v1013, %v1221
        %v1439 = vsel %vm1420, %v1086, %v1223
        %v1440 = vsel %vm1420, %v1016, %v1225
        %v1441 = vsel %vm1420, %v1087, %v1227
        %v1442 = vsel %vm1420, %v1019, %v1229
        %v1443 = vsel %vm1420, %v1088, %v1231
        %v1444 = vsel %vm1420, %v1022, %v1233
        %v1445 = vsel %vm1420, %v1089, %v1235
        %v1446 = vsel %vm1420, %v1025, %v1237
        %v1447 = vsel %vm1420, %v1090, %v1239
        %v1448 = vsel %vm1420, %v1028, %v1241
        %v1449 = vsel %vm1420, %v1091, %v1243
        %v1450 = vsel %vm1420, %v1031, %v1245
        %v1451 = vsel %vm1420, %v1092, %v1247
        %v1452 = vsel %vm1420, %v1034, %v1249
        %v1453 = vsel %vm1420, %v1093, %v1251
        %v1454 = vsel %vm1420, %v1037, %v1253
        %v1455 = vsel %vm1420, %v1094, %v1255
        %v1456 = vsel %vm1420, %v1040, %v1257
        %vm1457 = vcmask 523264
        %v1458 = vsel %vm1457, %v1421, %v1313
        %v1459 = vsel %vm1457, %v1422, %v1315
        %v1460 = vsel %vm1457, %v1423, %v1317
        %v1461 = vsel %vm1457, %v1424, %v1319
        %v1462 = vsel %vm1457, %v1425, %v1321
        %v1463 = vsel %vm1457, %v1426, %v1323
        %v1464 = vsel %vm1457, %v1427, %v1325
        %v1465 = vsel %vm1457, %v1428, %v1327
        %v1466 = vsel %vm1457, %v1429, %v1329
        %v1467 = vsel %vm1457, %v1430, %v1331
        %v1468 = vsel %vm1457, %v1431, %v1333
        %v1469 = vsel %vm1457, %v1432, %v1335
        %v1470 = vsel %vm1457, %v1433, %v1337
        %v1471 = vsel %vm1457, %v1434, %v1339
        %v1472 = vsel %vm1457, %v1435, %v1341
        %v1473 = vsel %vm1457, %v1436, %v1343
        %v1474 = vsel %vm1457, %v1437, %v1345
        %v1475 = vsel %vm1457, %v1438, %v1347
        %v1476 = vsel %vm1457, %v1439, %v1349
        %v1477 = vsel %vm1457, %v1440, %v1351
        %v1478 = vsel %vm1457, %v1441, %v1353
        %v1479 = vsel %vm1457, %v1442, %v1355
        %v1480 = vsel %vm1457, %v1443, %v1357
        %v1481 = vsel %vm1457, %v1444, %v1359
        %v1482 = vsel %vm1457, %v1445, %v1361
        %v1483 = vsel %vm1457, %v1446, %v1363
        %v1484 = vsel %vm1457, %v1447, %v1365
        %v1485 = vsel %vm1457, %v1448, %v1367
        %v1486 = vsel %vm1457, %v1449, %v1369
        %v1487 = vsel %vm1457, %v1450, %v1371
        %v1488 = vsel %vm1457, %v1451, %v1373
        %v1489 = vsel %vm1457, %v1452, %v1375
        %v1490 = vsel %vm1457, %v1453, %v1377
        %v1491 = vsel %vm1457, %v1454, %v1379
        %v1492 = vsel %vm1457, %v1455, %v1381
        %v1493 = vsel %vm1457, %v1456, %v1383
        %v1494 = vpack.c.bf16 %v1458, %v1458
        %v1495 = vpack.c.bf16 %v1459, %v1459
        %v1496 = vpack.c.bf16 %v1460, %v1460
        %v1497 = vpack.c.bf16 %v1461, %v1461
        %v1498 = vpack.c.bf16 %v1462, %v1462
        %v1499 = vpack.c.bf16 %v1463, %v1463
        %v1500 = vpack.c.bf16 %v1464, %v1464
        %v1501 = vpack.c.bf16 %v1465, %v1465
        %v1502 = vpack.c.bf16 %v1466, %v1466
        %v1503 = vpack.c.bf16 %v1467, %v1467
        %v1504 = vpack.c.bf16 %v1468, %v1468
        %v1505 = vpack.c.bf16 %v1469, %v1469
        %v1506 = vpack.c.bf16 %v1470, %v1470
        %v1507 = vpack.c.bf16 %v1471, %v1471
        %v1508 = vpack.c.bf16 %v1472, %v1472
        %v1509 = vpack.c.bf16 %v1473, %v1473
        %v1510 = vpack.c.bf16 %v1474, %v1474
        %v1511 = vpack.c.bf16 %v1475, %v1475
        %v1512 = vpack.c.bf16 %v1476, %v1476
        %v1513 = vpack.c.bf16 %v1477, %v1477
        %v1514 = vpack.c.bf16 %v1478, %v1478
        %v1515 = vpack.c.bf16 %v1479, %v1479
        %v1516 = vpack.c.bf16 %v1480, %v1480
        %v1517 = vpack.c.bf16 %v1481, %v1481
        %v1518 = vpack.c.bf16 %v1482, %v1482
        %v1519 = vpack.c.bf16 %v1483, %v1483
        %v1520 = vpack.c.bf16 %v1484, %v1484
        %v1521 = vpack.c.bf16 %v1485, %v1485
        %v1522 = vpack.c.bf16 %v1486, %v1486
        %v1523 = vpack.c.bf16 %v1487, %v1487
        %v1524 = vpack.c.bf16 %v1488, %v1488
        %v1525 = vpack.c.bf16 %v1489, %v1489
        %v1526 = vpack.c.bf16 %v1490, %v1490
        %v1527 = vpack.c.bf16 %v1491, %v1491
        %v1528 = vpack.c.bf16 %v1492, %v1492
        %v1529 = vpack.c.bf16 %v1493, %v1493
        %vm1530 = vcmask 781312
        %1531 = vst.msk [vmem:[#allocation2] sm:$0xf] %vm1530, %v1494
        %1532 = vst.msk [vmem:[#allocation2 + $0x4] sm:$0xf] %vm1530, %v1495
        %1533 = vst.msk [vmem:[#allocation2 + $0x8] sm:$0xf] %vm1530, %v1496
        %1534 = vst.msk [vmem:[#allocation2 + $0xc] sm:$0xf] %vm1530, %v1497
        %1535 = vst.msk [vmem:[#allocation2 + $0x10] sm:$0xf] %vm1530, %v1498
        %1536 = vst.msk [vmem:[#allocation2 + $0x14] sm:$0xf] %vm1530, %v1499
        %1537 = vst.msk [vmem:[#allocation2 + $0x18] sm:$0xf] %vm1530, %v1500
        %1538 = vst.msk [vmem:[#allocation2 + $0x1c] sm:$0xf] %vm1530, %v1501
        %1539 = vst.msk [vmem:[#allocation2 + $0x20] sm:$0xf] %vm1530, %v1502
        %1540 = vst.msk [vmem:[#allocation2 + $0x24] sm:$0xf] %vm1530, %v1503
        %1541 = vst.msk [vmem:[#allocation2 + $0x28] sm:$0xf] %vm1530, %v1504
        %1542 = vst.msk [vmem:[#allocation2 + $0x2c] sm:$0xf] %vm1530, %v1505
        %1543 = vst.msk [vmem:[#allocation2 + $0x30] sm:$0xf] %vm1530, %v1506
        %1544 = vst.msk [vmem:[#allocation2 + $0x34] sm:$0xf] %vm1530, %v1507
        %1545 = vst.msk [vmem:[#allocation2 + $0x38] sm:$0xf] %vm1530, %v1508
        %1546 = vst.msk [vmem:[#allocation2 + $0x3c] sm:$0xf] %vm1530, %v1509
        %1547 = vst.msk [vmem:[#allocation2 + $0x40] sm:$0xf] %vm1530, %v1510
        %1548 = vst.msk [vmem:[#allocation2 + $0x44] sm:$0xf] %vm1530, %v1511
        %1549 = vst.msk [vmem:[#allocation2 + $0x48] sm:$0xf] %vm1530, %v1512
        %1550 = vst.msk [vmem:[#allocation2 + $0x4c] sm:$0xf] %vm1530, %v1513
        %1551 = vst.msk [vmem:[#allocation2 + $0x50] sm:$0xf] %vm1530, %v1514
        %1552 = vst.msk [vmem:[#allocation2 + $0x54] sm:$0xf] %vm1530, %v1515
        %1553 = vst.msk [vmem:[#allocation2 + $0x58] sm:$0xf] %vm1530, %v1516
        %1554 = vst.msk [vmem:[#allocation2 + $0x5c] sm:$0xf] %vm1530, %v1517
        %1555 = vst.msk [vmem:[#allocation2 + $0x60] sm:$0xf] %vm1530, %v1518
        %1556 = vst.msk [vmem:[#allocation2 + $0x64] sm:$0xf] %vm1530, %v1519
        %1557 = vst.msk [vmem:[#allocation2 + $0x68] sm:$0xf] %vm1530, %v1520
        %1558 = vst.msk [vmem:[#allocation2 + $0x6c] sm:$0xf] %vm1530, %v1521
        %1559 = vst.msk [vmem:[#allocation2 + $0x70] sm:$0xf] %vm1530, %v1522
        %1560 = vst.msk [vmem:[#allocation2 + $0x74] sm:$0xf] %vm1530, %v1523
        %1561 = vst.msk [vmem:[#allocation2 + $0x78] sm:$0xf] %vm1530, %v1524
        %1562 = vst.msk [vmem:[#allocation2 + $0x7c] sm:$0xf] %vm1530, %v1525
        %1563 = vst.msk [vmem:[#allocation2 + $0x80] sm:$0xf] %vm1530, %v1526
        %1564 = vst.msk [vmem:[#allocation2 + $0x84] sm:$0xf] %vm1530, %v1527
        %1565 = vst.msk [vmem:[#allocation2 + $0x88] sm:$0xf] %vm1530, %v1528
        %1566 = vst.msk [vmem:[#allocation2 + $0x8c] sm:$0xf] %vm1530, %v1529
        %v1567 = vld [vmem:[#allocation2] sm:$0xf]
        %v1568 = vld [vmem:[#allocation2 + $0x4] sm:$0xf]
        %v1569 = vld [vmem:[#allocation2 + $0x8] sm:$0xf]
        %v1570 = vld [vmem:[#allocation2 + $0xc] sm:$0xf]
        %v1571 = vld [vmem:[#allocation2 + $0x10] sm:$0xf]
        %v1572 = vld [vmem:[#allocation2 + $0x14] sm:$0xf]
        %v1573 = vld [vmem:[#allocation2 + $0x18] sm:$0xf]
        %v1574 = vld [vmem:[#allocation2 + $0x1c] sm:$0xf]
        %v1575 = vld [vmem:[#allocation2 + $0x20] sm:$0xf]
        %v1576 = vld [vmem:[#allocation2 + $0x24] sm:$0xf]
        %v1577 = vld [vmem:[#allocation2 + $0x28] sm:$0xf]
        %v1578 = vld [vmem:[#allocation2 + $0x2c] sm:$0xf]
        %v1579 = vld [vmem:[#allocation2 + $0x30] sm:$0xf]
        %v1580 = vld [vmem:[#allocation2 + $0x34] sm:$0xf]
        %v1581 = vld [vmem:[#allocation2 + $0x38] sm:$0xf]
        %v1582 = vld [vmem:[#allocation2 + $0x3c] sm:$0xf]
        %v1583 = vld [vmem:[#allocation2 + $0x40] sm:$0xf]
        %v1584 = vld [vmem:[#allocation2 + $0x44] sm:$0xf]
        %v1585 = vld [vmem:[#allocation2 + $0x48] sm:$0xf]
        %v1586 = vld [vmem:[#allocation2 + $0x4c] sm:$0xf]
        %v1587 = vld [vmem:[#allocation2 + $0x50] sm:$0xf]
        %v1588 = vld [vmem:[#allocation2 + $0x54] sm:$0xf]
        %v1589 = vld [vmem:[#allocation2 + $0x58] sm:$0xf]
        %v1590 = vld [vmem:[#allocation2 + $0x5c] sm:$0xf]
        %v1591 = vld [vmem:[#allocation2 + $0x60] sm:$0xf]
        %v1592 = vld [vmem:[#allocation2 + $0x64] sm:$0xf]
        %v1593 = vld [vmem:[#allocation2 + $0x68] sm:$0xf]
        %v1594 = vld [vmem:[#allocation2 + $0x6c] sm:$0xf]
        %v1595 = vld [vmem:[#allocation2 + $0x70] sm:$0xf]
        %v1596 = vld [vmem:[#allocation2 + $0x74] sm:$0xf]
        %v1597 = vld [vmem:[#allocation2 + $0x78] sm:$0xf]
        %v1598 = vld [vmem:[#allocation2 + $0x7c] sm:$0xf]
        %v1599 = vld [vmem:[%s4] sm:$0xf]
        %v1600 = vld [vmem:[%s4 + $0x4] sm:$0xf]
        %v1601 = vld [vmem:[%s4 + $0x8] sm:$0xf]
        %v1602 = vld [vmem:[%s4 + $0xc] sm:$0xf]
        %v1603 = vld [vmem:[%s4 + $0x10] sm:$0xf]
        %v1604 = vld [vmem:[%s4 + $0x14] sm:$0xf]
        %v1605 = vld [vmem:[%s4 + $0x18] sm:$0xf]
        %v1606 = vld [vmem:[%s4 + $0x1c] sm:$0xf]
        %v1607 = vld [vmem:[%s4 + $0x20] sm:$0xf]
        %v1608 = vld [vmem:[%s4 + $0x24] sm:$0xf]
        %v1609 = vld [vmem:[%s4 + $0x28] sm:$0xf]
        %v1610 = vld [vmem:[%s4 + $0x2c] sm:$0xf]
        %v1611 = vld [vmem:[#allocation2 + $0x80] sm:$0xf]
        %v1612 = vld [vmem:[#allocation2 + $0x84] sm:$0xf]
        %s1613 = scalar_lea.vmem %s4, 48
        %v1614 = vld [vmem:[%s1613] sm:$0xf]
        %v1615 = vld [vmem:[%s1613 + $0x4] sm:$0xf]
        %v1616 = vld [vmem:[%s1613 + $0x8] sm:$0xf]
        %v1617 = vld [vmem:[%s1613 + $0xc] sm:$0xf]
        %v1618 = vld [vmem:[%s1613 + $0x10] sm:$0xf]
        %v1619 = vld [vmem:[%s1613 + $0x14] sm:$0xf]
        %v1620 = vld [vmem:[%s1613 + $0x18] sm:$0xf]
        %v1621 = vld [vmem:[%s1613 + $0x1c] sm:$0xf]
        %v1622 = vld [vmem:[%s1613 + $0x20] sm:$0xf]
        %v1623 = vld [vmem:[%s1613 + $0x24] sm:$0xf]
        %v1624 = vld [vmem:[%s1613 + $0x28] sm:$0xf]
        %v1625 = vld [vmem:[%s1613 + $0x2c] sm:$0xf]
        %v1658 = vunpack.c.l.b16 %v1569
        %v1659 = vunpack.c.l.b16 %v1570
        %v1660 = vunpack.c.l.b16 %v1571
        %v1661 = vunpack.c.l.b16 %v1572
        %v1662 = vunpack.c.l.b16 %v1573
        %v1663 = vunpack.c.l.b16 %v1574
        %v1664 = vunpack.c.l.b16 %v1575
        %v1665 = vunpack.c.l.b16 %v1576
        %v1666 = vunpack.c.l.b16 %v1577
        %v1667 = vunpack.c.l.b16 %v1578
        %v1668 = vunpack.c.l.b16 %v1579
        %v1669 = vunpack.c.l.b16 %v1580
        %v1670 = vunpack.c.l.b16 %v1581
        %v1671 = vunpack.c.l.b16 %v1582
        %v1672 = vunpack.c.l.b16 %v1583
        %v1673 = vunpack.c.l.b16 %v1584
        %v1674 = vunpack.c.l.b16 %v1585
        %v1675 = vunpack.c.l.b16 %v1586
        %v1676 = vunpack.c.l.b16 %v1587
        %v1677 = vunpack.c.l.b16 %v1588
        %v1678 = vunpack.c.l.b16 %v1589
        %v1679 = vunpack.c.l.b16 %v1590
        %v1680 = vunpack.c.l.b16 %v1591
        %v1681 = vunpack.c.l.b16 %v1592
        %v1682 = vunpack.c.l.b16 %v1593
        %v1683 = vunpack.c.l.b16 %v1594
        %v1684 = vunpack.c.l.b16 %v1595
        %v1685 = vunpack.c.l.b16 %v1596
        %v1686 = vunpack.c.l.b16 %v1597
        %v1687 = vunpack.c.l.b16 %v1598
        %v1688 = vunpack.c.l.b16 %v1611
        %v1689 = vunpack.c.l.b16 %v1612
        %v1690 = vpack.c.b16 %v1659, %v1658
        %v1691 = vpack.c.b16 %v1661, %v1660
        %v1692 = vpack.c.b16 %v1663, %v1662
        %v1693 = vpack.c.b16 %v1665, %v1664
        %v1694 = vpack.c.b16 %v1667, %v1666
        %v1695 = vpack.c.b16 %v1669, %v1668
        %v1696 = vpack.c.b16 %v1671, %v1670
        %v1697 = vpack.c.b16 %v1673, %v1672
        %v1698 = vpack.c.b16 %v1675, %v1674
        %v1699 = vpack.c.b16 %v1677, %v1676
        %v1700 = vpack.c.b16 %v1679, %v1678
        %v1701 = vpack.c.b16 %v1681, %v1680
        %v1702 = vpack.c.b16 %v1683, %v1682
        %v1703 = vpack.c.b16 %v1685, %v1684
        %v1704 = vpack.c.b16 %v1687, %v1686
        %v1705 = vpack.c.b16 %v1689, %v1688
        %v1718 = vunpack.c.l.b16 %v1614
        %v1719 = vunpack.c.l.b16 %v1615
        %v1720 = vunpack.c.l.b16 %v1616
        %v1721 = vunpack.c.l.b16 %v1617
        %v1722 = vunpack.c.l.b16 %v1618
        %v1723 = vunpack.c.l.b16 %v1619
        %v1724 = vunpack.c.l.b16 %v1620
        %v1725 = vunpack.c.l.b16 %v1621
        %v1726 = vunpack.c.l.b16 %v1622
        %v1727 = vunpack.c.l.b16 %v1623
        %v1728 = vunpack.c.l.b16 %v1624
        %v1729 = vunpack.c.l.b16 %v1625
        %v1730 = vpack.c.b16 %v1719, %v1718
        %v1731 = vpack.c.b16 %v1721, %v1720
        %v1732 = vpack.c.b16 %v1723, %v1722
        %v1733 = vpack.c.b16 %v1725, %v1724
        %v1734 = vpack.c.b16 %v1727, %v1726
        %v1735 = vpack.c.b16 %v1729, %v1728
        %vm1742 = vcmask 785408
        %v1744 = vsel %vm1742, %v1690, 0
        %v1747 = vsel %vm1742, %v1691, 0
        %v1750 = vsel %vm1742, %v1692, 0
        %v1753 = vsel %vm1742, %v1693, 0
        %v1756 = vsel %vm1742, %v1694, 0
        %v1759 = vsel %vm1742, %v1695, 0
        %v1762 = vsel %vm1742, %v1696, 0
        %v1765 = vsel %vm1742, %v1697, 0
        %v1768 = vsel %vm1742, %v1698, 0
        %v1771 = vsel %vm1742, %v1699, 0
        %v1774 = vsel %vm1742, %v1700, 0
        %v1777 = vsel %vm1742, %v1701, 0
        %v1780 = vsel %vm1742, %v1702, 0
        %v1783 = vsel %vm1742, %v1703, 0
        %v1786 = vsel %vm1742, %v1704, 0
        %v1789 = vsel %vm1742, %v1705, 0
        %1791 = vmatpush.bf16.msra.mxu0 0
        %1792 = vmatpush.bf16.msra.mxu0 0
        %1793 = vmatpush.bf16.msra.mxu0 %v1735
        %1794 = vmatpush.bf16.msra.mxu0 %v1734
        %1795 = vmatpush.bf16.msra.mxu0 %v1733
        %1796 = vmatpush.bf16.msra.mxu0 %v1732
        %1797 = vmatpush.bf16.msra.mxu0 %v1731
        %1798 = vmatpush.bf16.msra.mxu0 %v1730
        %1799 = vmatmul.bf16.gmra.mxu0 %v1744
        %v1800 = vpop.f32.mrf.mxu0
        %v1801 = vadd.f32 0.0, %v1800
        %v1802 = vpop.f32.mrf.mxu0
        %v1803 = vadd.f32 0.0, %v1802
        %1804 = vmatmul.bf16.gmra.mxu0 %v1747
        %v1805 = vpop.f32.mrf.mxu0
        %v1806 = vadd.f32 0.0, %v1805
        %v1807 = vpop.f32.mrf.mxu0
        %v1808 = vadd.f32 0.0, %v1807
        %1809 = vmatmul.bf16.gmra.mxu0 %v1750
        %v1810 = vpop.f32.mrf.mxu0
        %v1811 = vadd.f32 0.0, %v1810
        %v1812 = vpop.f32.mrf.mxu0
        %v1813 = vadd.f32 0.0, %v1812
        %1814 = vmatmul.bf16.gmra.mxu0 %v1753
        %v1815 = vpop.f32.mrf.mxu0
        %v1816 = vadd.f32 0.0, %v1815
        %v1817 = vpop.f32.mrf.mxu0
        %v1818 = vadd.f32 0.0, %v1817
        %1819 = vmatmul.bf16.gmra.mxu0 %v1756
        %v1820 = vpop.f32.mrf.mxu0
        %v1821 = vadd.f32 0.0, %v1820
        %v1822 = vpop.f32.mrf.mxu0
        %v1823 = vadd.f32 0.0, %v1822
        %1824 = vmatmul.bf16.gmra.mxu0 %v1759
        %v1825 = vpop.f32.mrf.mxu0
        %v1826 = vadd.f32 0.0, %v1825
        %v1827 = vpop.f32.mrf.mxu0
        %v1828 = vadd.f32 0.0, %v1827
        %1829 = vmatmul.bf16.gmra.mxu0 %v1762
        %v1830 = vpop.f32.mrf.mxu0
        %v1831 = vadd.f32 0.0, %v1830
        %v1832 = vpop.f32.mrf.mxu0
        %v1833 = vadd.f32 0.0, %v1832
        %1834 = vmatmul.bf16.gmra.mxu0 %v1765
        %v1835 = vpop.f32.mrf.mxu0
        %v1836 = vadd.f32 0.0, %v1835
        %v1837 = vpop.f32.mrf.mxu0
        %v1838 = vadd.f32 0.0, %v1837
        %1839 = vmatmul.bf16.gmra.mxu0 %v1768
        %v1840 = vpop.f32.mrf.mxu0
        %v1841 = vadd.f32 0.0, %v1840
        %v1842 = vpop.f32.mrf.mxu0
        %v1843 = vadd.f32 0.0, %v1842
        %1844 = vmatmul.bf16.gmra.mxu0 %v1771
        %v1845 = vpop.f32.mrf.mxu0
        %v1846 = vadd.f32 0.0, %v1845
        %v1847 = vpop.f32.mrf.mxu0
        %v1848 = vadd.f32 0.0, %v1847
        %1849 = vmatmul.bf16.gmra.mxu0 %v1774
        %v1850 = vpop.f32.mrf.mxu0
        %v1851 = vadd.f32 0.0, %v1850
        %v1852 = vpop.f32.mrf.mxu0
        %v1853 = vadd.f32 0.0, %v1852
        %1854 = vmatmul.bf16.gmra.mxu0 %v1777
        %v1855 = vpop.f32.mrf.mxu0
        %v1856 = vadd.f32 0.0, %v1855
        %v1857 = vpop.f32.mrf.mxu0
        %v1858 = vadd.f32 0.0, %v1857
        %1859 = vmatmul.bf16.gmra.mxu0 %v1780
        %v1860 = vpop.f32.mrf.mxu0
        %v1861 = vadd.f32 0.0, %v1860
        %v1862 = vpop.f32.mrf.mxu0
        %v1863 = vadd.f32 0.0, %v1862
        %1864 = vmatmul.bf16.gmra.mxu0 %v1783
        %v1865 = vpop.f32.mrf.mxu0
        %v1866 = vadd.f32 0.0, %v1865
        %v1867 = vpop.f32.mrf.mxu0
        %v1868 = vadd.f32 0.0, %v1867
        %1869 = vmatmul.bf16.gmra.mxu0 %v1786
        %v1870 = vpop.f32.mrf.mxu0
        %v1871 = vadd.f32 0.0, %v1870
        %v1872 = vpop.f32.mrf.mxu0
        %v1873 = vadd.f32 0.0, %v1872
        %1874 = vmatmul.bf16.gmra.mxu0 %v1789
        %v1875 = vpop.f32.mrf.mxu0
        %v1876 = vadd.f32 0.0, %v1875
        %v1877 = vpop.f32.mrf.mxu0
        %v1878 = vadd.f32 0.0, %v1877
        %1879 = vdwg.mxu0
        %v1882 = vunpack.c.l.b16 %v1567
        %v1883 = vunpack.c.l.b16 %v1568
        %v1884 = vpack.c.b16 %v1883, %v1882
        %v1897 = vunpack.c.l.b16 %v1599
        %v1898 = vunpack.c.l.b16 %v1600
        %v1899 = vunpack.c.l.b16 %v1601
        %v1900 = vunpack.c.l.b16 %v1602
        %v1901 = vunpack.c.l.b16 %v1603
        %v1902 = vunpack.c.l.b16 %v1604
        %v1903 = vunpack.c.l.b16 %v1605
        %v1904 = vunpack.c.l.b16 %v1606
        %v1905 = vunpack.c.l.b16 %v1607
        %v1906 = vunpack.c.l.b16 %v1608
        %v1907 = vunpack.c.l.b16 %v1609
        %v1908 = vunpack.c.l.b16 %v1610
        %v1909 = vpack.c.b16 %v1898, %v1897
        %v1910 = vpack.c.b16 %v1900, %v1899
        %v1911 = vpack.c.b16 %v1902, %v1901
        %v1912 = vpack.c.b16 %v1904, %v1903
        %v1913 = vpack.c.b16 %v1906, %v1905
        %v1914 = vpack.c.b16 %v1908, %v1907
        %v1922 = vsel %vm1742, %v1884, 0
        %1924 = vmatpush.bf16.msra.mxu0 0
        %1925 = vmatpush.bf16.msra.mxu0 0
        %1926 = vmatpush.bf16.msra.mxu0 %v1914
        %1927 = vmatpush.bf16.msra.mxu0 %v1913
        %1928 = vmatpush.bf16.msra.mxu0 %v1912
        %1929 = vmatpush.bf16.msra.mxu0 %v1911
        %1930 = vmatpush.bf16.msra.mxu0 %v1910
        %1931 = vmatpush.bf16.msra.mxu0 %v1909
        %1932 = vmatmul.bf16.gmra.mxu0 %v1922
        %v1933 = vpop.f32.mrf.mxu0
        %v1934 = vadd.f32 %v1801, %v1933
        %v1935 = vpop.f32.mrf.mxu0
        %v1936 = vadd.f32 %v1803, %v1935
        %1937 = vmatmul.bf16.gmra.mxu0 %v1744
        %v1938 = vpop.f32.mrf.mxu0
        %v1939 = vadd.f32 %v1806, %v1938
        %v1940 = vpop.f32.mrf.mxu0
        %v1941 = vadd.f32 %v1808, %v1940
        %1942 = vmatmul.bf16.gmra.mxu0 %v1747
        %v1943 = vpop.f32.mrf.mxu0
        %v1944 = vadd.f32 %v1811, %v1943
        %v1945 = vpop.f32.mrf.mxu0
        %v1946 = vadd.f32 %v1813, %v1945
        %1947 = vmatmul.bf16.gmra.mxu0 %v1750
        %v1948 = vpop.f32.mrf.mxu0
        %v1949 = vadd.f32 %v1816, %v1948
        %v1950 = vpop.f32.mrf.mxu0
        %v1951 = vadd.f32 %v1818, %v1950
        %1952 = vmatmul.bf16.gmra.mxu0 %v1753
        %v1953 = vpop.f32.mrf.mxu0
        %v1954 = vadd.f32 %v1821, %v1953
        %v1955 = vpop.f32.mrf.mxu0
        %v1956 = vadd.f32 %v1823, %v1955
        %1957 = vmatmul.bf16.gmra.mxu0 %v1756
        %v1958 = vpop.f32.mrf.mxu0
        %v1959 = vadd.f32 %v1826, %v1958
        %v1960 = vpop.f32.mrf.mxu0
        %v1961 = vadd.f32 %v1828, %v1960
        %1962 = vmatmul.bf16.gmra.mxu0 %v1759
        %v1963 = vpop.f32.mrf.mxu0
        %v1964 = vadd.f32 %v1831, %v1963
        %v1965 = vpop.f32.mrf.mxu0
        %v1966 = vadd.f32 %v1833, %v1965
        %1967 = vmatmul.bf16.gmra.mxu0 %v1762
        %v1968 = vpop.f32.mrf.mxu0
        %v1969 = vadd.f32 %v1836, %v1968
        %v1970 = vpop.f32.mrf.mxu0
        %v1971 = vadd.f32 %v1838, %v1970
        %1972 = vmatmul.bf16.gmra.mxu0 %v1765
        %v1973 = vpop.f32.mrf.mxu0
        %v1974 = vadd.f32 %v1841, %v1973
        %v1975 = vpop.f32.mrf.mxu0
        %v1976 = vadd.f32 %v1843, %v1975
        %1977 = vmatmul.bf16.gmra.mxu0 %v1768
        %v1978 = vpop.f32.mrf.mxu0
        %v1979 = vadd.f32 %v1846, %v1978
        %v1980 = vpop.f32.mrf.mxu0
        %v1981 = vadd.f32 %v1848, %v1980
        %1982 = vmatmul.bf16.gmra.mxu0 %v1771
        %v1983 = vpop.f32.mrf.mxu0
        %v1984 = vadd.f32 %v1851, %v1983
        %v1985 = vpop.f32.mrf.mxu0
        %v1986 = vadd.f32 %v1853, %v1985
        %1987 = vmatmul.bf16.gmra.mxu0 %v1774
        %v1988 = vpop.f32.mrf.mxu0
        %v1989 = vadd.f32 %v1856, %v1988
        %v1990 = vpop.f32.mrf.mxu0
        %v1991 = vadd.f32 %v1858, %v1990
        %1992 = vmatmul.bf16.gmra.mxu0 %v1777
        %v1993 = vpop.f32.mrf.mxu0
        %v1994 = vadd.f32 %v1861, %v1993
        %v1995 = vpop.f32.mrf.mxu0
        %v1996 = vadd.f32 %v1863, %v1995
        %1997 = vmatmul.bf16.gmra.mxu0 %v1780
        %v1998 = vpop.f32.mrf.mxu0
        %v1999 = vadd.f32 %v1866, %v1998
        %v2000 = vpop.f32.mrf.mxu0
        %v2001 = vadd.f32 %v1868, %v2000
        %2002 = vmatmul.bf16.gmra.mxu0 %v1783
        %v2003 = vpop.f32.mrf.mxu0
        %v2004 = vadd.f32 %v1871, %v2003
        %v2005 = vpop.f32.mrf.mxu0
        %v2006 = vadd.f32 %v1873, %v2005
        %2007 = vmatmul.bf16.gmra.mxu0 %v1786
        %v2008 = vpop.f32.mrf.mxu0
        %v2009 = vadd.f32 %v1876, %v2008
        %v2010 = vpop.f32.mrf.mxu0
        %v2011 = vadd.f32 %v1878, %v2010
        %2012 = vdwg.mxu0
        %v2013 = vld [vmem:[#allocation2 + $0x10] sm:$0xf]
        %v2014 = vld [vmem:[#allocation2 + $0x14] sm:$0xf]
        %v2015 = vld [vmem:[#allocation2 + $0x18] sm:$0xf]
        %v2016 = vld [vmem:[#allocation2 + $0x1c] sm:$0xf]
        %v2017 = vld [vmem:[#allocation2 + $0x20] sm:$0xf]
        %v2018 = vld [vmem:[#allocation2 + $0x24] sm:$0xf]
        %v2019 = vld [vmem:[#allocation2 + $0x28] sm:$0xf]
        %v2020 = vld [vmem:[#allocation2 + $0x2c] sm:$0xf]
        %v2021 = vld [vmem:[#allocation2 + $0x30] sm:$0xf]
        %v2022 = vld [vmem:[#allocation2 + $0x34] sm:$0xf]
        %v2023 = vld [vmem:[#allocation2 + $0x38] sm:$0xf]
        %v2024 = vld [vmem:[#allocation2 + $0x3c] sm:$0xf]
        %v2025 = vld [vmem:[#allocation2 + $0x40] sm:$0xf]
        %v2026 = vld [vmem:[#allocation2 + $0x44] sm:$0xf]
        %v2027 = vld [vmem:[#allocation2 + $0x48] sm:$0xf]
        %v2028 = vld [vmem:[#allocation2 + $0x4c] sm:$0xf]
        %v2029 = vld [vmem:[#allocation2 + $0x50] sm:$0xf]
        %v2030 = vld [vmem:[#allocation2 + $0x54] sm:$0xf]
        %v2031 = vld [vmem:[#allocation2 + $0x58] sm:$0xf]
        %v2032 = vld [vmem:[#allocation2 + $0x5c] sm:$0xf]
        %v2033 = vld [vmem:[#allocation2 + $0x60] sm:$0xf]
        %v2034 = vld [vmem:[#allocation2 + $0x64] sm:$0xf]
        %v2035 = vld [vmem:[#allocation2 + $0x68] sm:$0xf]
        %v2036 = vld [vmem:[#allocation2 + $0x6c] sm:$0xf]
        %v2037 = vld [vmem:[#allocation2 + $0x70] sm:$0xf]
        %v2038 = vld [vmem:[#allocation2 + $0x74] sm:$0xf]
        %v2039 = vld [vmem:[#allocation2 + $0x78] sm:$0xf]
        %v2040 = vld [vmem:[#allocation2 + $0x7c] sm:$0xf]
        %v2041 = vld [vmem:[#allocation2 + $0x80] sm:$0xf]
        %v2042 = vld [vmem:[#allocation2 + $0x84] sm:$0xf]
        %v2043 = vld [vmem:[#allocation2 + $0x88] sm:$0xf]
        %v2044 = vld [vmem:[#allocation2 + $0x8c] sm:$0xf]
        %s2045 = scalar_lea.vmem %s4, 96
        %v2046 = vld [vmem:[%s2045] sm:$0xf]
        %v2047 = vld [vmem:[%s2045 + $0x4] sm:$0xf]
        %v2048 = vld [vmem:[%s2045 + $0x8] sm:$0xf]
        %v2049 = vld [vmem:[%s2045 + $0xc] sm:$0xf]
        %v2050 = vld [vmem:[%s2045 + $0x10] sm:$0xf]
        %v2051 = vld [vmem:[%s2045 + $0x14] sm:$0xf]
        %v2052 = vld [vmem:[%s2045 + $0x18] sm:$0xf]
        %v2053 = vld [vmem:[%s2045 + $0x1c] sm:$0xf]
        %v2054 = vld [vmem:[%s2045 + $0x20] sm:$0xf]
        %v2055 = vld [vmem:[%s2045 + $0x24] sm:$0xf]
        %v2056 = vld [vmem:[%s2045 + $0x28] sm:$0xf]
        %v2057 = vld [vmem:[%s2045 + $0x2c] sm:$0xf]
        %v2090 = vunpack.c.l.b16 %v2013
        %v2091 = vunpack.c.l.b16 %v2014
        %v2092 = vunpack.c.l.b16 %v2015
        %v2093 = vunpack.c.l.b16 %v2016
        %v2094 = vunpack.c.l.b16 %v2017
        %v2095 = vunpack.c.l.b16 %v2018
        %v2096 = vunpack.c.l.b16 %v2019
        %v2097 = vunpack.c.l.b16 %v2020
        %v2098 = vunpack.c.l.b16 %v2021
        %v2099 = vunpack.c.l.b16 %v2022
        %v2100 = vunpack.c.l.b16 %v2023
        %v2101 = vunpack.c.l.b16 %v2024
        %v2102 = vunpack.c.l.b16 %v2025
        %v2103 = vunpack.c.l.b16 %v2026
        %v2104 = vunpack.c.l.b16 %v2027
        %v2105 = vunpack.c.l.b16 %v2028
        %v2106 = vunpack.c.l.b16 %v2029
        %v2107 = vunpack.c.l.b16 %v2030
        %v2108 = vunpack.c.l.b16 %v2031
        %v2109 = vunpack.c.l.b16 %v2032
        %v2110 = vunpack.c.l.b16 %v2033
        %v2111 = vunpack.c.l.b16 %v2034
        %v2112 = vunpack.c.l.b16 %v2035
        %v2113 = vunpack.c.l.b16 %v2036
        %v2114 = vunpack.c.l.b16 %v2037
        %v2115 = vunpack.c.l.b16 %v2038
        %v2116 = vunpack.c.l.b16 %v2039
        %v2117 = vunpack.c.l.b16 %v2040
        %v2118 = vunpack.c.l.b16 %v2041
        %v2119 = vunpack.c.l.b16 %v2042
        %v2120 = vunpack.c.l.b16 %v2043
        %v2121 = vunpack.c.l.b16 %v2044
        %v2122 = vpack.c.b16 %v2091, %v2090
        %v2123 = vpack.c.b16 %v2093, %v2092
        %v2124 = vpack.c.b16 %v2095, %v2094
        %v2125 = vpack.c.b16 %v2097, %v2096
        %v2126 = vpack.c.b16 %v2099, %v2098
        %v2127 = vpack.c.b16 %v2101, %v2100
        %v2128 = vpack.c.b16 %v2103, %v2102
        %v2129 = vpack.c.b16 %v2105, %v2104
        %v2130 = vpack.c.b16 %v2107, %v2106
        %v2131 = vpack.c.b16 %v2109, %v2108
        %v2132 = vpack.c.b16 %v2111, %v2110
        %v2133 = vpack.c.b16 %v2113, %v2112
        %v2134 = vpack.c.b16 %v2115, %v2114
        %v2135 = vpack.c.b16 %v2117, %v2116
        %v2136 = vpack.c.b16 %v2119, %v2118
        %v2137 = vpack.c.b16 %v2121, %v2120
        %v2150 = vunpack.c.l.b16 %v2046
        %v2151 = vunpack.c.l.b16 %v2047
        %v2152 = vunpack.c.l.b16 %v2048
        %v2153 = vunpack.c.l.b16 %v2049
        %v2154 = vunpack.c.l.b16 %v2050
        %v2155 = vunpack.c.l.b16 %v2051
        %v2156 = vunpack.c.l.b16 %v2052
        %v2157 = vunpack.c.l.b16 %v2053
        %v2158 = vunpack.c.l.b16 %v2054
        %v2159 = vunpack.c.l.b16 %v2055
        %v2160 = vunpack.c.l.b16 %v2056
        %v2161 = vunpack.c.l.b16 %v2057
        %v2162 = vpack.c.b16 %v2151, %v2150
        %v2163 = vpack.c.b16 %v2153, %v2152
        %v2164 = vpack.c.b16 %v2155, %v2154
        %v2165 = vpack.c.b16 %v2157, %v2156
        %v2166 = vpack.c.b16 %v2159, %v2158
        %v2167 = vpack.c.b16 %v2161, %v2160
        %v2175 = vsel %vm1742, %v2122, 0
        %v2178 = vsel %vm1742, %v2123, 0
        %v2181 = vsel %vm1742, %v2124, 0
        %v2184 = vsel %vm1742, %v2125, 0
        %v2187 = vsel %vm1742, %v2126, 0
        %v2190 = vsel %vm1742, %v2127, 0
        %v2193 = vsel %vm1742, %v2128, 0
        %v2196 = vsel %vm1742, %v2129, 0
        %v2199 = vsel %vm1742, %v2130, 0
        %v2202 = vsel %vm1742, %v2131, 0
        %v2205 = vsel %vm1742, %v2132, 0
        %v2208 = vsel %vm1742, %v2133, 0
        %v2211 = vsel %vm1742, %v2134, 0
        %v2214 = vsel %vm1742, %v2135, 0
        %v2217 = vsel %vm1742, %v2136, 0
        %v2220 = vsel %vm1742, %v2137, 0
        %2222 = vmatpush.bf16.msra.mxu0 0
        %2223 = vmatpush.bf16.msra.mxu0 0
        %2224 = vmatpush.bf16.msra.mxu0 %v2167
        %2225 = vmatpush.bf16.msra.mxu0 %v2166
        %2226 = vmatpush.bf16.msra.mxu0 %v2165
        %2227 = vmatpush.bf16.msra.mxu0 %v2164
        %2228 = vmatpush.bf16.msra.mxu0 %v2163
        %2229 = vmatpush.bf16.msra.mxu0 %v2162
        %2230 = vmatmul.bf16.gmra.mxu0 %v2175
        %v2231 = vpop.f32.mrf.mxu0
        %v2232 = vadd.f32 0.0, %v2231
        %v2233 = vpop.f32.mrf.mxu0
        %v2234 = vadd.f32 0.0, %v2233
        %2235 = vmatmul.bf16.gmra.mxu0 %v2178
        %v2236 = vpop.f32.mrf.mxu0
        %v2237 = vadd.f32 0.0, %v2236
        %v2238 = vpop.f32.mrf.mxu0
        %v2239 = vadd.f32 0.0, %v2238
        %2240 = vmatmul.bf16.gmra.mxu0 %v2181
        %v2241 = vpop.f32.mrf.mxu0
        %v2242 = vadd.f32 0.0, %v2241
        %v2243 = vpop.f32.mrf.mxu0
        %v2244 = vadd.f32 0.0, %v2243
        %2245 = vmatmul.bf16.gmra.mxu0 %v2184
        %v2246 = vpop.f32.mrf.mxu0
        %v2247 = vadd.f32 0.0, %v2246
        %v2248 = vpop.f32.mrf.mxu0
        %v2249 = vadd.f32 0.0, %v2248
        %2250 = vmatmul.bf16.gmra.mxu0 %v2187
        %v2251 = vpop.f32.mrf.mxu0
        %v2252 = vadd.f32 0.0, %v2251
        %v2253 = vpop.f32.mrf.mxu0
        %v2254 = vadd.f32 0.0, %v2253
        %2255 = vmatmul.bf16.gmra.mxu0 %v2190
        %v2256 = vpop.f32.mrf.mxu0
        %v2257 = vadd.f32 0.0, %v2256
        %v2258 = vpop.f32.mrf.mxu0
        %v2259 = vadd.f32 0.0, %v2258
        %2260 = vmatmul.bf16.gmra.mxu0 %v2193
        %v2261 = vpop.f32.mrf.mxu0
        %v2262 = vadd.f32 0.0, %v2261
        %v2263 = vpop.f32.mrf.mxu0
        %v2264 = vadd.f32 0.0, %v2263
        %2265 = vmatmul.bf16.gmra.mxu0 %v2196
        %v2266 = vpop.f32.mrf.mxu0
        %v2267 = vadd.f32 0.0, %v2266
        %v2268 = vpop.f32.mrf.mxu0
        %v2269 = vadd.f32 0.0, %v2268
        %2270 = vmatmul.bf16.gmra.mxu0 %v2199
        %v2271 = vpop.f32.mrf.mxu0
        %v2272 = vadd.f32 0.0, %v2271
        %v2273 = vpop.f32.mrf.mxu0
        %v2274 = vadd.f32 0.0, %v2273
        %2275 = vmatmul.bf16.gmra.mxu0 %v2202
        %v2276 = vpop.f32.mrf.mxu0
        %v2277 = vadd.f32 0.0, %v2276
        %v2278 = vpop.f32.mrf.mxu0
        %v2279 = vadd.f32 0.0, %v2278
        %2280 = vmatmul.bf16.gmra.mxu0 %v2205
        %v2281 = vpop.f32.mrf.mxu0
        %v2282 = vadd.f32 0.0, %v2281
        %v2283 = vpop.f32.mrf.mxu0
        %v2284 = vadd.f32 0.0, %v2283
        %2285 = vmatmul.bf16.gmra.mxu0 %v2208
        %v2286 = vpop.f32.mrf.mxu0
        %v2287 = vadd.f32 0.0, %v2286
        %v2288 = vpop.f32.mrf.mxu0
        %v2289 = vadd.f32 0.0, %v2288
        %2290 = vmatmul.bf16.gmra.mxu0 %v2211
        %v2291 = vpop.f32.mrf.mxu0
        %v2292 = vadd.f32 0.0, %v2291
        %v2293 = vpop.f32.mrf.mxu0
        %v2294 = vadd.f32 0.0, %v2293
        %2295 = vmatmul.bf16.gmra.mxu0 %v2214
        %v2296 = vpop.f32.mrf.mxu0
        %v2297 = vadd.f32 0.0, %v2296
        %v2298 = vpop.f32.mrf.mxu0
        %v2299 = vadd.f32 0.0, %v2298
        %2300 = vmatmul.bf16.gmra.mxu0 %v2217
        %v2301 = vpop.f32.mrf.mxu0
        %v2302 = vadd.f32 0.0, %v2301
        %v2303 = vpop.f32.mrf.mxu0
        %v2304 = vadd.f32 0.0, %v2303
        %2305 = vmatmul.bf16.gmra.mxu0 %v2220
        %v2306 = vpop.f32.mrf.mxu0
        %v2307 = vadd.f32 0.0, %v2306
        %v2308 = vpop.f32.mrf.mxu0
        %v2309 = vadd.f32 0.0, %v2308
        %2310 = vdwg.mxu0
        %v2311 = vadd.f32 %v1934, %v2232
        %v2312 = vadd.f32 %v1936, %v2234
        %v2313 = vadd.f32 %v1939, %v2237
        %v2314 = vadd.f32 %v1941, %v2239
        %v2315 = vadd.f32 %v1944, %v2242
        %v2316 = vadd.f32 %v1946, %v2244
        %v2317 = vadd.f32 %v1949, %v2247
        %v2318 = vadd.f32 %v1951, %v2249
        %v2319 = vadd.f32 %v1954, %v2252
        %v2320 = vadd.f32 %v1956, %v2254
        %v2321 = vadd.f32 %v1959, %v2257
        %v2322 = vadd.f32 %v1961, %v2259
        %v2323 = vadd.f32 %v1964, %v2262
        %v2324 = vadd.f32 %v1966, %v2264
        %v2325 = vadd.f32 %v1969, %v2267
        %v2326 = vadd.f32 %v1971, %v2269
        %v2327 = vadd.f32 %v1974, %v2272
        %v2328 = vadd.f32 %v1976, %v2274
        %v2329 = vadd.f32 %v1979, %v2277
        %v2330 = vadd.f32 %v1981, %v2279
        %v2331 = vadd.f32 %v1984, %v2282
        %v2332 = vadd.f32 %v1986, %v2284
        %v2333 = vadd.f32 %v1989, %v2287
        %v2334 = vadd.f32 %v1991, %v2289
        %v2335 = vadd.f32 %v1994, %v2292
        %v2336 = vadd.f32 %v1996, %v2294
        %v2337 = vadd.f32 %v1999, %v2297
        %v2338 = vadd.f32 %v2001, %v2299
        %v2339 = vadd.f32 %v2004, %v2302
        %v2340 = vadd.f32 %v2006, %v2304
        %v2341 = vadd.f32 %v2009, %v2307
        %v2342 = vadd.f32 %v2011, %v2309
        %v2343 = vld [vmem:[%s5] sm:$0x1]
        %v2345 = vperm.slane %v2343, 0
        %v2347 = vmul.f32 %v2311, %v2345
        %v2348 = vmul.f32 %v2312, %v2345
        %v2349 = vmul.f32 %v2313, %v2345
        %v2350 = vmul.f32 %v2314, %v2345
        %v2351 = vmul.f32 %v2315, %v2345
        %v2352 = vmul.f32 %v2316, %v2345
        %v2353 = vmul.f32 %v2317, %v2345
        %v2354 = vmul.f32 %v2318, %v2345
        %v2355 = vmul.f32 %v2319, %v2345
        %v2356 = vmul.f32 %v2320, %v2345
        %v2357 = vmul.f32 %v2321, %v2345
        %v2358 = vmul.f32 %v2322, %v2345
        %v2359 = vmul.f32 %v2323, %v2345
        %v2360 = vmul.f32 %v2324, %v2345
        %v2361 = vmul.f32 %v2325, %v2345
        %v2362 = vmul.f32 %v2326, %v2345
        %v2363 = vmul.f32 %v2327, %v2345
        %v2364 = vmul.f32 %v2328, %v2345
        %v2365 = vmul.f32 %v2329, %v2345
        %v2366 = vmul.f32 %v2330, %v2345
        %v2367 = vmul.f32 %v2331, %v2345
        %v2368 = vmul.f32 %v2332, %v2345
        %v2369 = vmul.f32 %v2333, %v2345
        %v2370 = vmul.f32 %v2334, %v2345
        %v2371 = vmul.f32 %v2335, %v2345
        %v2372 = vmul.f32 %v2336, %v2345
        %v2373 = vmul.f32 %v2337, %v2345
        %v2374 = vmul.f32 %v2338, %v2345
        %v2375 = vmul.f32 %v2339, %v2345
        %v2376 = vmul.f32 %v2340, %v2345
        %v2377 = vmul.f32 %v2341, %v2345
        %v2378 = vmul.f32 %v2342, %v2345
        %v2379 = vld [vmem:[%s6] sm:$0x1]
        %v2381 = vperm.slane %v2379, 0
        %v2383 = vadd.f32 %v2347, %v2381
        %v2384 = vadd.f32 %v2348, %v2381
        %v2385 = vadd.f32 %v2349, %v2381
        %v2386 = vadd.f32 %v2350, %v2381
        %v2387 = vadd.f32 %v2351, %v2381
        %v2388 = vadd.f32 %v2352, %v2381
        %v2389 = vadd.f32 %v2353, %v2381
        %v2390 = vadd.f32 %v2354, %v2381
        %v2391 = vadd.f32 %v2355, %v2381
        %v2392 = vadd.f32 %v2356, %v2381
        %v2393 = vadd.f32 %v2357, %v2381
        %v2394 = vadd.f32 %v2358, %v2381
        %v2395 = vadd.f32 %v2359, %v2381
        %v2396 = vadd.f32 %v2360, %v2381
        %v2397 = vadd.f32 %v2361, %v2381
        %v2398 = vadd.f32 %v2362, %v2381
        %v2399 = vadd.f32 %v2363, %v2381
        %v2400 = vadd.f32 %v2364, %v2381
        %v2401 = vadd.f32 %v2365, %v2381
        %v2402 = vadd.f32 %v2366, %v2381
        %v2403 = vadd.f32 %v2367, %v2381
        %v2404 = vadd.f32 %v2368, %v2381
        %v2405 = vadd.f32 %v2369, %v2381
        %v2406 = vadd.f32 %v2370, %v2381
        %v2407 = vadd.f32 %v2371, %v2381
        %v2408 = vadd.f32 %v2372, %v2381
        %v2409 = vadd.f32 %v2373, %v2381
        %v2410 = vadd.f32 %v2374, %v2381
        %v2411 = vadd.f32 %v2375, %v2381
        %v2412 = vadd.f32 %v2376, %v2381
        %v2413 = vadd.f32 %v2377, %v2381
        %v2414 = vadd.f32 %v2378, %v2381
        %v2415 = vmax.f32 %v2383, 0.0
        %v2416 = vmax.f32 %v2384, 0.0
        %v2417 = vmax.f32 %v2385, 0.0
        %v2418 = vmax.f32 %v2386, 0.0
        %v2419 = vmax.f32 %v2387, 0.0
        %v2420 = vmax.f32 %v2388, 0.0
        %v2421 = vmax.f32 %v2389, 0.0
        %v2422 = vmax.f32 %v2390, 0.0
        %v2423 = vmax.f32 %v2391, 0.0
        %v2424 = vmax.f32 %v2392, 0.0
        %v2425 = vmax.f32 %v2393, 0.0
        %v2426 = vmax.f32 %v2394, 0.0
        %v2427 = vmax.f32 %v2395, 0.0
        %v2428 = vmax.f32 %v2396, 0.0
        %v2429 = vmax.f32 %v2397, 0.0
        %v2430 = vmax.f32 %v2398, 0.0
        %v2431 = vmax.f32 %v2399, 0.0
        %v2432 = vmax.f32 %v2400, 0.0
        %v2433 = vmax.f32 %v2401, 0.0
        %v2434 = vmax.f32 %v2402, 0.0
        %v2435 = vmax.f32 %v2403, 0.0
        %v2436 = vmax.f32 %v2404, 0.0
        %v2437 = vmax.f32 %v2405, 0.0
        %v2438 = vmax.f32 %v2406, 0.0
        %v2439 = vmax.f32 %v2407, 0.0
        %v2440 = vmax.f32 %v2408, 0.0
        %v2441 = vmax.f32 %v2409, 0.0
        %v2442 = vmax.f32 %v2410, 0.0
        %v2443 = vmax.f32 %v2411, 0.0
        %v2444 = vmax.f32 %v2412, 0.0
        %v2445 = vmax.f32 %v2413, 0.0
        %v2446 = vmax.f32 %v2414, 0.0
        %2447 = vst.msk [vmem:[%s295] sm:$0xff] %vm1420, %v2415
        %2448 = vst.msk [vmem:[%s295 + $0x8] sm:$0xff] %vm1420, %v2416
        %2449 = vst.msk [vmem:[%s295 + $0x10] sm:$0xff] %vm1420, %v2417
        %2450 = vst.msk [vmem:[%s295 + $0x18] sm:$0xff] %vm1420, %v2418
        %2451 = vst.msk [vmem:[%s295 + $0x20] sm:$0xff] %vm1420, %v2419
        %2452 = vst.msk [vmem:[%s295 + $0x28] sm:$0xff] %vm1420, %v2420
        %2453 = vst.msk [vmem:[%s295 + $0x30] sm:$0xff] %vm1420, %v2421
        %2454 = vst.msk [vmem:[%s295 + $0x38] sm:$0xff] %vm1420, %v2422
        %2455 = vst.msk [vmem:[%s295 + $0x40] sm:$0xff] %vm1420, %v2423
        %2456 = vst.msk [vmem:[%s295 + $0x48] sm:$0xff] %vm1420, %v2424
        %2457 = vst.msk [vmem:[%s295 + $0x50] sm:$0xff] %vm1420, %v2425
        %2458 = vst.msk [vmem:[%s295 + $0x58] sm:$0xff] %vm1420, %v2426
        %2459 = vst.msk [vmem:[%s295 + $0x60] sm:$0xff] %vm1420, %v2427
        %2460 = vst.msk [vmem:[%s295 + $0x68] sm:$0xff] %vm1420, %v2428
        %2461 = vst.msk [vmem:[%s295 + $0x70] sm:$0xff] %vm1420, %v2429
        %2462 = vst.msk [vmem:[%s295 + $0x78] sm:$0xff] %vm1420, %v2430
        %2463 = vst.msk [vmem:[%s295 + $0x80] sm:$0xff] %vm1420, %v2431
        %2464 = vst.msk [vmem:[%s295 + $0x88] sm:$0xff] %vm1420, %v2432
        %2465 = vst.msk [vmem:[%s295 + $0x90] sm:$0xff] %vm1420, %v2433
        %2466 = vst.msk [vmem:[%s295 + $0x98] sm:$0xff] %vm1420, %v2434
        %2467 = vst.msk [vmem:[%s295 + $0xa0] sm:$0xff] %vm1420, %v2435
        %2468 = vst.msk [vmem:[%s295 + $0xa8] sm:$0xff] %vm1420, %v2436
        %2469 = vst.msk [vmem:[%s295 + $0xb0] sm:$0xff] %vm1420, %v2437
        %2470 = vst.msk [vmem:[%s295 + $0xb8] sm:$0xff] %vm1420, %v2438
        %2471 = vst.msk [vmem:[%s295 + $0xc0] sm:$0xff] %vm1420, %v2439
        %2472 = vst.msk [vmem:[%s295 + $0xc8] sm:$0xff] %vm1420, %v2440
        %2473 = vst.msk [vmem:[%s295 + $0xd0] sm:$0xff] %vm1420, %v2441
        %2474 = vst.msk [vmem:[%s295 + $0xd8] sm:$0xff] %vm1420, %v2442
        %2475 = vst.msk [vmem:[%s295 + $0xe0] sm:$0xff] %vm1420, %v2443
        %2476 = vst.msk [vmem:[%s295 + $0xe8] sm:$0xff] %vm1420, %v2444
        %2477 = vst.msk [vmem:[%s295 + $0xf0] sm:$0xff] %vm1420, %v2445
        %2478 = vst.msk [vmem:[%s295 + $0xf8] sm:$0xff] %vm1420, %v2446
        %s2479 = sand.u32 %s197, 1
        %s2480 = scalar_lea.sflag [#allocation4], %s2479
        %s2481 = sand.u32 %s197, 1
        %s2482 = smul.addr %s2481, 256
        %s2483 = scalar_lea.vmem [#allocation3], %s2482
        // Predicated region
        $region49: #{double_conv_forward.1} parent=47 // pred_check
          %p2484 = pneg %p207
        $region50: #{double_conv_forward.1} parent=47 // pred_check_branch
          %2486 = sbr.rel (%p2484) target = $region52
        $region51: #{double_conv_forward.1} parent=47 // pred_region
          %s2487 = smul.u32 16, %s26
          %2489 = vsyncadd %s2480, 0
          %s2490 = smul.addr %s2487, 2
          %s2491 = smul.addr %s25, 32
          %s2492 = sadd.s32 %s2490, %s2491
          %s2493 = smul.addr %s2492, 8
          %s2494 = scalar_lea.hbm %s7, %s2493
          %s2495 = sshll.u32 %s2483, 4
          %s2496 = int_to_ptr.vmem [resolvable:$true] %s2495
          %s2497 = sshll.u32 %s2494, 4
          %s2498 = int_to_ptr.hbm [resolvable:$true] %s2497
          %2503 = dma.vmem_to_hbm [thread:$0]  %s2496, 4096, %s2498, %s2480, 128, 128, 8
        $region52: #{double_conv_forward.1} parent=47 // pred_fallthru
          _
      $region48: #{double_conv_forward.1} parent=5 // pred_fallthru
        _
      %p2504 = scmp.le.s32.totalorder 2, %s16
      // Predicated region
      $region53: #{double_conv_forward.1} parent=5 // pred_check
        %p2505 = pneg %p2504
      $region54: #{double_conv_forward.1} parent=5 // pred_check_branch
        %2507 = sbr.rel (%p2505) target = $region56
      $region55: #{double_conv_forward.1} parent=5 // pred_region
        %s2508 = ssub.s32 %s16, 2
        // Predicated region
        $region57: #{double_conv_forward.1} parent=55 // pred_check
          %p2509 = pneg %p213
        $region58: #{double_conv_forward.1} parent=55 // pred_check_branch
          %2511 = sbr.rel (%p2509) target = $region60
        $region59: #{double_conv_forward.1} parent=55 // pred_region
          %s2512 = sand.u32 %s198, 1
          %s2513 = scalar_lea.sflag [#allocation4], %s2512
          %s2514 = sand.u32 %s198, 1
          %s2515 = smul.addr %s2514, 256
          %s2516 = scalar_lea.vmem [#allocation3], %s2515
          %2518 = dma.done %s2513, 4096
        $region60: #{double_conv_forward.1} parent=55 // pred_fallthru
          _
      $region56: #{double_conv_forward.1} parent=5 // pred_fallthru
        _
    $region6: #{double_conv_forward.1} parent=1 // loop_footer
      %s20 = sadd.s32 1, %s16
    $region7: #{double_conv_forward.1} parent=1 // loop_footer_branch
      %15 = sbr.rel target = $region3
    $region8: #{double_conv_forward.1} parent=1 // loop_exit
      _
    %2519 = vsyncpa [#allocation4], 1
    %s2520 = scalar_lea.sflag [#allocation4], 1
    %2521 = vsyncpa %s2520, 1

</llo_original>
